<compile_context>
chip_gen: v5e
topology: v5e:2x2
jax: 0.10.0
libtpu: 0.0.40
codegen_flags: <defaults>
</compile_context>

<pallas_src>
import math

import jax
import jax.numpy as jnp
from jax import lax
from jax.experimental import pallas as pl
from jax.experimental.pallas import tpu as pltpu


# ---------------------------------------------------------------------------
# Wrapper-side preprocessing (layout plumbing + weight fusion only).
# ---------------------------------------------------------------------------
def build_cheb_noid(supports, cheb_k):
    """Non-identity Chebyshev supports, support-major / cheb-minor order.

    PyTorch AGCN builds, per support S: [I, S, 2*S@T_{k-1} - T_{k-2}, ...].
    The identity terms are folded analytically into the fused weights, so only
    the non-identity polynomials are stacked here (same order as the
    corresponding AGCN weight row blocks).
    """
    assert cheb_k >= 2, "cheb_k >= 2 required (cheb_k == 1 is identity-only)"
    mats = []
    for s in supports:
        terms = [jnp.eye(s.shape[0], dtype=s.dtype), s]
        for _ in range(2, cheb_k):
            terms.append(2.0 * (s @ terms[-1]) - terms[-2])
        mats.extend(terms[1:])                     # drop the identity term
    return jnp.stack(mats, axis=0)                 # (Ks, N, N), Ks = ns*(cheb_k-1)


def build_fused_weights(wg, wu, num_supports, cheb_k, din, dh):
    """Fuse the PyTorch AGCN gate/update weights into two matrices.

    NOTE: assumes the AGCN weight rows are ordered support-major /
    Chebyshev-minor with an identity term per support, exactly as built by the
    reference AGCN in this module (support_ks = [I, S, ...] per support).

    Returns:
      w_big : ((ks+1)*(din+dh), 3*dh)   columns = [gate z | gate r | cand-x]
              rows = [identity block; non-identity cheb blocks], where the
              candidate columns have ZERO rows for the state part (the
              candidate's state path uses z*state and goes through w_zs).
      w_zs  : ((ks+1)*dh, dh)           state(=z*s) part of the update weights.
    """
    cin = din + dh
    ks = num_supports * (cheb_k - 1)
    g = wg.reshape(num_supports, cheb_k, cin, 2 * dh)
    u = wu.reshape(num_supports, cheb_k, cin, dh)
    g_id = g[:, 0].sum(axis=0)                                  # (cin, 2dh)
    u_id = u[:, 0].sum(axis=0)                                  # (cin, dh)
    g_no = g[:, 1:].reshape(ks, cin, 2 * dh)
    u_no = u[:, 1:].reshape(ks, cin, dh)

    def cand_cols(u_blk):
        # x rows kept, state rows zeroed (candidate sees z*state, not state).
        return jnp.concatenate(
            [u_blk[:din], jnp.zeros((dh, dh), u_blk.dtype)], axis=0)

    big = [jnp.concatenate([g_id, cand_cols(u_id)], axis=1)]
    for j in range(ks):
        big.append(jnp.concatenate([g_no[j], cand_cols(u_no[j])], axis=1))
    w_big = jnp.concatenate(big, axis=0)                        # ((ks+1)*cin, 3dh)

    zs_rows = [u_id[din:]] + [u_no[j][din:] for j in range(ks)]
    w_zs = jnp.concatenate(zs_rows, axis=0)                     # ((ks+1)*dh, dh)
    return w_big, w_zs


# ---------------------------------------------------------------------------
# Fused encoder kernel: all layers, all timesteps, B_blk batch elems per step.
# ---------------------------------------------------------------------------
def _make_encoder_kernel(num_layers, seq_len, dh, ks, compute_dtype):
    def mm(a, b):
        # bf16 (or f32) operands, f32 accumulation on the MXU.
        return jnp.dot(a, b, preferred_element_type=jnp.float32)

    def kernel(*refs):
        sup_ref = refs[0]                         # (Ks, M, M)      compute_dtype
        x_ref = refs[1]                           # (1, T, M, Din0) f32
        h0_ref = refs[2]                          # (1, L, M, Dh)   f32
        w_refs = refs[3:3 + 3 * num_layers]       # per layer: w_big, w_zs, b_big
        out_seq_ref = refs[3 + 3 * num_layers]    # (1, T, M, Dh)   f32
        out_hid_ref = refs[4 + 3 * num_layers]    # (1, L, M, Dh)   f32

        def cell(l, inp, s):
            w_big_ref = w_refs[3 * l]
            w_zs_ref = w_refs[3 * l + 1]
            b_big_ref = w_refs[3 * l + 2]

            # One cast of the concatenated (x, state) activations per cell.
            xs = jnp.concatenate([inp, s], axis=-1).astype(compute_dtype)

            # Graph conv of [x|s] with the block-diagonal supports, shared by
            # the gate and the candidate x-path, lane-concatenated so the
            # whole path is ONE weight matmul (K = (ks+1)*(Din+Dh)).
            feats = [xs] + [mm(sup_ref[j], xs).astype(compute_dtype)
                            for j in range(ks)]
            f_all = jnp.concatenate(feats, axis=-1)            # (M, (ks+1)*cin)

            zh = mm(f_all, w_big_ref[...]) + b_big_ref[...]    # (M, 3*Dh) f32
            zr = jax.nn.sigmoid(zh[:, :2 * dh])
            z = zr[:, :dh]
            r = zr[:, dh:]
            hcx = zh[:, 2 * dh:]                 # candidate x-contribution (+bu)

            zs = (z * s).astype(compute_dtype)                 # single cast
            fz = jnp.concatenate(
                [zs] + [mm(sup_ref[j], zs).astype(compute_dtype)
                        for j in range(ks)], axis=-1)          # (M, (ks+1)*Dh)
            hc = jnp.tanh(hcx + mm(fz, w_zs_ref[...]))

            # MegaCRN's r-gated combination (deliberately not textbook GRU).
            return r * s + (1.0 - r) * hc

        def step(t, states):
            inp = x_ref[0, t]                                  # (M, Din0) f32
            new_states = []
            for l in range(num_layers):                        # small, static
                h = cell(l, inp, states[l])
                new_states.append(h)
                inp = h
            out_seq_ref[0, t] = inp                            # last layer out
            return tuple(new_states)

        init = tuple(h0_ref[0, l] for l in range(num_layers))
        final = lax.fori_loop(0, seq_len, step, init)          # real loop, not unroll
        for l in range(num_layers):
            out_hid_ref[0, l] = final[l]

    return kernel


def adcrnn_encoder(x, init_states, supports, params, cheb_k, *,
                   b_blk=None, compute_dtype=jnp.float32):
    """Fused ADCRNN_Encoder forward.

    x           : (B, T, N, Din)  float32
    init_states : list (per layer) of (B, N, Dh) float32
    supports    : list of dense (N, N) adjacency matrices
    params      : list (per layer) of dicts with PyTorch-shaped
                  'wg' (2*cheb_k*(din_l+Dh), 2*Dh), 'bg' (1, 2*Dh),
                  'wu' (2*cheb_k*(din_l+Dh),   Dh), 'bu' (1,   Dh)
    b_blk       : batch elements processed per grid step (default: all of B).
    Returns (out_seq (B,T,N,Dh) f32, [ (B,N,Dh) f32 per layer ]).
    """
    B, T, N, din0 = x.shape
    dh = init_states[0].shape[-1]
    num_layers = len(params)
    num_supports = len(supports)

    if b_blk is None:
        b_blk = B
    assert B % b_blk == 0, "pad B to a multiple of b_blk for the general case"
    nb = B // b_blk
    M = b_blk * N

    # Block-diagonal supports: the graph conv for all b_blk batch elements
    # becomes one MXU matmul with M = b_blk*N rows (small-N regime).
    cheb = build_cheb_noid(supports, cheb_k)                   # (Ks, N, N) f32
    ks = cheb.shape[0]
    eye_b = jnp.eye(b_blk, dtype=cheb.dtype)
    cheb_blk = jnp.stack([jnp.kron(eye_b, cheb[j]) for j in range(ks)],
                         axis=0).astype(compute_dtype)         # (Ks, M, M)

    # Batch-blocked layouts (wrapper-side layout plumbing only).
    x_blk = (x.reshape(nb, b_blk, T, N, din0)
              .transpose(0, 2, 1, 3, 4)
              .reshape(nb, T, M, din0)).astype(jnp.float32)

    h0 = jnp.stack(init_states, axis=0)                        # (L, B, N, Dh)
    h0_blk = (h0.transpose(1, 0, 2, 3)
                .reshape(nb, b_blk, num_layers, N, dh)
                .transpose(0, 2, 1, 3, 4)
                .reshape(nb, num_layers, M, dh)).astype(jnp.float32)

    weight_args, weight_specs = [], []
    for i, p in enumerate(params):
        din_l = din0 if i == 0 else dh
        w_big, w_zs = build_fused_weights(p["wg"], p["wu"],
                                          num_supports, cheb_k, din_l, dh)
        b_big = jnp.concatenate(
            [p["bg"].reshape(-1), p["bu"].reshape(-1)]).reshape(1, 3 * dh)
        for arr in (w_big.astype(compute_dtype),
                    w_zs.astype(compute_dtype),
                    b_big.astype(jnp.float32)):
            weight_args.append(arr)
            # Grid-invariant (constant index map) -> fetched once.
            weight_specs.append(pl.BlockSpec(arr.shape, lambda i: (0, 0)))

    kernel = _make_encoder_kernel(num_layers, T, dh, ks, compute_dtype)

    in_specs = [
        pl.BlockSpec((ks, M, M), lambda i: (0, 0, 0)),          # supports
        pl.BlockSpec((1, T, M, din0), lambda i: (i, 0, 0, 0)),  # full seq / step
        pl.BlockSpec((1, num_layers, M, dh), lambda i: (i, 0, 0, 0)),
    ] + weight_specs

    out_shape = (
        jax.ShapeDtypeStruct((nb, T, M, dh), jnp.float32),
        jax.ShapeDtypeStruct((nb, num_layers, M, dh), jnp.float32),
    )
    out_specs = (
        pl.BlockSpec((1, T, M, dh), lambda i: (i, 0, 0, 0)),
        pl.BlockSpec((1, num_layers, M, dh), lambda i: (i, 0, 0, 0)),
    )

    seq_blk, hid_blk = pl.pallas_call(
        kernel,
        out_shape=out_shape,
        grid=(nb,),
        in_specs=in_specs,
        out_specs=out_specs,
        compiler_params=pltpu.CompilerParams(
            dimension_semantics=("parallel",)),   # one recurrence block per TC
    )(cheb_blk, x_blk, h0_blk, *weight_args)

    out_seq = (seq_blk.reshape(nb, T, b_blk, N, dh)
                      .transpose(0, 2, 1, 3, 4)
                      .reshape(B, T, N, dh))
    out_hid = (hid_blk.reshape(nb, num_layers, b_blk, N, dh)
                      .transpose(1, 0, 2, 3, 4)
                      .reshape(num_layers, B, N, dh))
    return out_seq, [out_hid[l] for l in range(num_layers)]


# ---------------------------------------------------------------------------
# Parameter init (PyTorch-equivalent shapes).
# ---------------------------------------------------------------------------
def xavier_normal(key, shape):
    fan_in, fan_out = shape
    std = math.sqrt(2.0 / (fan_in + fan_out))
    return std * jax.random.normal(key, shape, dtype=jnp.float32)


def init_encoder_params(key, node_num, dim_in, dim_out, cheb_k, num_layers):
    params = []
    for i in range(num_layers):
        cell_in = (dim_in if i == 0 else dim_out) + dim_out
        kg, ku, kbg, kbu, key = jax.random.split(key, 5)
        params.append(dict(
            wg=xavier_normal(kg, (2 * cheb_k * cell_in, 2 * dim_out)),
            bg=0.1 * jax.random.normal(kbg, (1, 2 * dim_out), dtype=jnp.float32),
            wu=xavier_normal(ku, (2 * cheb_k * cell_in, dim_out)),
            bu=0.1 * jax.random.normal(kbu, (1, dim_out), dtype=jnp.float32),
        ))
    return params


# ---------------------------------------------------------------------------
# Pure-JAX reference (faithful to the PyTorch AGCN / AGCRNCell / Encoder).
# ---------------------------------------------------------------------------
def build_cheb_full(supports, cheb_k):
    n = supports[0].shape[0]
    mats = []
    for s in supports:
        terms = [jnp.eye(n, dtype=s.dtype), s]
        for _ in range(2, cheb_k):
            terms.append(2.0 * (s @ terms[-1]) - terms[-2])
        mats.extend(terms)
    return jnp.stack(mats, axis=0)


def _agcn_ref(x, cheb, w, b):
    xg = jnp.concatenate(
        [jnp.einsum("nm,bmc->bnc", cheb[k], x) for k in range(cheb.shape[0])],
        axis=-1)
    return jnp.einsum("bni,io->bno", xg, w) + b


def _cell_ref(x, state, cheb, p, dh):
    xs = jnp.concatenate([x, state], axis=-1)
    zr = jax.nn.sigmoid(_agcn_ref(xs, cheb, p["wg"], p["bg"]))
    z, r = zr[..., :dh], zr[..., dh:]
    cand = jnp.concatenate([x, z * state], axis=-1)
    hc = jnp.tanh(_agcn_ref(cand, cheb, p["wu"], p["bu"]))
    return r * state + (1.0 - r) * hc


def _encoder_ref(x, init_states, supports, params, cheb_k, dh):
    cheb = build_cheb_full(supports, cheb_k)
    current = x
    hiddens = []
    for i, p in enumerate(params):
        state = init_states[i]
        inner = []
        for t in range(current.shape[1]):
            state = _cell_ref(current[:, t], state, cheb, p, dh)
            inner.append(state)
        hiddens.append(state)
        current = jnp.stack(inner, axis=1)
    return current, hiddens


# ---------------------------------------------------------------------------
if __name__ == "__main__":
    B, T, N = 4, 8, 16
    dim_in, dim_out = 2, 32
    cheb_k, num_layers = 3, 2      # MegaCRN default cheb_k=3

    key = jax.random.PRNGKey(0)
    kx, kg1, kg2, kp = jax.random.split(key, 4)

    x = jax.random.normal(kx, (B, T, N, dim_in), dtype=jnp.float32)
    # Two dense supports (row-stochastic, as produced by MegaCRN's softmax graphs).
    s1 = jax.nn.softmax(jax.random.normal(kg1, (N, N), dtype=jnp.float32), -1)
    s2 = jax.nn.softmax(jax.random.normal(kg2, (N, N), dtype=jnp.float32), -1)
    supports = [s1, s2]

    init_states = [jnp.zeros((B, N, dim_out), jnp.float32)
                   for _ in range(num_layers)]
    params = init_encoder_params(kp, N, dim_in, dim_out, cheb_k, num_layers)

    # Reference (pure JAX, faithful to PyTorch).
    ref_seq, ref_hidden = _encoder_ref(x, init_states, supports, params,
                                       cheb_k, dim_out)

    # --- fused Pallas kernel, f32 operands (exact path), 2 batch elems/step ---
    out_seq, out_hidden = adcrnn_encoder(x, init_states, supports, params,
                                         cheb_k, b_blk=2)
    out_seq = jax.block_until_ready(out_seq)
    out_hidden = [jax.block_until_ready(h) for h in out_hidden]

    assert out_seq.shape == (B, T, N, dim_out)
    assert len(out_hidden) == num_layers
    assert jnp.allclose(out_seq, ref_seq, atol=2e-4, rtol=2e-4)
    for h, hr in zip(out_hidden, ref_hidden):
        assert h.shape == (B, N, dim_out)
        assert jnp.allclose(h, hr, atol=2e-4, rtol=2e-4)

    # --- bf16 operands + f32 MXU accumulation (K >= 128 after fusion) ---
    # NOTE: bf16 rounding compounds over the T-step recurrence; tolerance is
    # deliberately loose and should be re-validated for long sequences.
    out_seq_bf, out_hidden_bf = adcrnn_encoder(
        x, init_states, supports, params, cheb_k, b_blk=2,
        compute_dtype=jnp.bfloat16)
    out_seq_bf = jax.block_until_ready(out_seq_bf)
    assert bool(jnp.all(jnp.isfinite(out_seq_bf)))
    assert float(jnp.max(jnp.abs(out_seq_bf - ref_seq))) < 0.25
    for h, hr in zip(out_hidden_bf, ref_hidden):
        assert float(jnp.max(jnp.abs(h - hr))) < 0.25

    print("KERNEL_OK")
</pallas_src>

<mosaic_0001>
module attributes {stable_mosaic.version = 11 : i64} {
  func.func @kernel(%arg0: i32, %arg1: memref<4x32x32xf32, #tpu.memory_space<vmem>>, %arg2: memref<1x8x32x2xf32, #tpu.memory_space<vmem>>, %arg3: memref<1x2x32x32xf32, #tpu.memory_space<vmem>>, %arg4: memref<170x96xf32, #tpu.memory_space<vmem>>, %arg5: memref<160x32xf32, #tpu.memory_space<vmem>>, %arg6: memref<1x96xf32, #tpu.memory_space<vmem>>, %arg7: memref<320x96xf32, #tpu.memory_space<vmem>>, %arg8: memref<160x32xf32, #tpu.memory_space<vmem>>, %arg9: memref<1x96xf32, #tpu.memory_space<vmem>>, %arg10: memref<1x8x32x32xf32, #tpu.memory_space<vmem>>, %arg11: memref<1x2x32x32xf32, #tpu.memory_space<vmem>>) attributes {dimension_semantics = [#tpu.dimension_semantics<parallel>], iteration_bounds = array<i64: 2>, scalar_prefetch = 0 : i64, scratch_operands = 0 : i64, tpu.core_type = #tpu.core_type<tc>, window_params = [{pipeline_mode = #tpu.pipeline_mode<synchronous>, transform_indices = @transform_0, window_bounds = array<i64: 4, 32, 32>}, {transform_indices = @transform_1, window_bounds = array<i64: 1, 8, 32, 2>}, {transform_indices = @transform_2, window_bounds = array<i64: 1, 2, 32, 32>}, {pipeline_mode = #tpu.pipeline_mode<synchronous>, transform_indices = @transform_3, window_bounds = array<i64: 170, 96>}, {pipeline_mode = #tpu.pipeline_mode<synchronous>, transform_indices = @transform_4, window_bounds = array<i64: 160, 32>}, {pipeline_mode = #tpu.pipeline_mode<synchronous>, transform_indices = @transform_5, window_bounds = array<i64: 1, 96>}, {pipeline_mode = #tpu.pipeline_mode<synchronous>, transform_indices = @transform_6, window_bounds = array<i64: 320, 96>}, {pipeline_mode = #tpu.pipeline_mode<synchronous>, transform_indices = @transform_7, window_bounds = array<i64: 160, 32>}, {pipeline_mode = #tpu.pipeline_mode<synchronous>, transform_indices = @transform_8, window_bounds = array<i64: 1, 96>}, {transform_indices = @transform_9, window_bounds = array<i64: 1, 8, 32, 32>}, {transform_indices = @transform_10, window_bounds = array<i64: 1, 2, 32, 32>}]} {
    %c0 = arith.constant 0 : index
    %c0_0 = arith.constant 0 : index
    %c0_1 = arith.constant 0 : index
    %c0_2 = arith.constant 0 : index
    %0 = vector.load %arg3[%c0, %c0_0, %c0_1, %c0_2] : memref<1x2x32x32xf32, #tpu.memory_space<vmem>>, vector<1x1x32x32xf32>
    %1 = vector.shape_cast %0 : vector<1x1x32x32xf32> to vector<32x32xf32>
    %c0_3 = arith.constant 0 : index
    %c1 = arith.constant 1 : index
    %c0_4 = arith.constant 0 : index
    %c0_5 = arith.constant 0 : index
    %2 = vector.load %arg3[%c0_3, %c1, %c0_4, %c0_5] : memref<1x2x32x32xf32, #tpu.memory_space<vmem>>, vector<1x1x32x32xf32>
    %3 = vector.shape_cast %2 : vector<1x1x32x32xf32> to vector<32x32xf32>
    %c0_i32 = arith.constant 0 : i32
    %c8_i32 = arith.constant 8 : i32
    %4 = arith.addi %c0_i32, %c8_i32 : i32
    %c1_i32 = arith.constant 1 : i32
    %5:2 = scf.for %arg12 = %c0_i32 to %4 step %c1_i32 iter_args(%arg13 = %1, %arg14 = %3) -> (vector<32x32xf32>, vector<32x32xf32>)  : i32 {
      %c0_15 = arith.constant 0 : index
      %12 = arith.index_cast %arg12 : i32 to index
      %c0_16 = arith.constant 0 : index
      %c0_17 = arith.constant 0 : index
      %13 = vector.load %arg2[%c0_15, %12, %c0_16, %c0_17] : memref<1x8x32x2xf32, #tpu.memory_space<vmem>>, vector<1x1x32x2xf32>
      %14 = vector.shape_cast %13 : vector<1x1x32x2xf32> to vector<32x2xf32>
      %15 = tpu.concatenate %14, %arg13 in 1 : vector<32x2xf32>, vector<32x32xf32> -> vector<32x34xf32>
      %c0_18 = arith.constant 0 : index
      %c0_19 = arith.constant 0 : index
      %c0_20 = arith.constant 0 : index
      %16 = vector.load %arg1[%c0_18, %c0_19, %c0_20] : memref<4x32x32xf32, #tpu.memory_space<vmem>>, vector<1x32x32xf32>
      %17 = vector.shape_cast %16 : vector<1x32x32xf32> to vector<32x32xf32>
      %cst = arith.constant dense<0.000000e+00> : vector<32x34xf32>
      %18 = tpu.matmul %17, %15, %cst {dimension_numbers = #tpu.dot_dimension_numbers<[1], [0], [0], [1], [0, 0, 1, 1], [], []>} : vector<32x32xf32>, vector<32x34xf32>, vector<32x34xf32> -> vector<32x34xf32>
      %c1_21 = arith.constant 1 : index
      %c0_22 = arith.constant 0 : index
      %c0_23 = arith.constant 0 : index
      %19 = vector.load %arg1[%c1_21, %c0_22, %c0_23] : memref<4x32x32xf32, #tpu.memory_space<vmem>>, vector<1x32x32xf32>
      %20 = vector.shape_cast %19 : vector<1x32x32xf32> to vector<32x32xf32>
      %cst_24 = arith.constant dense<0.000000e+00> : vector<32x34xf32>
      %21 = tpu.matmul %20, %15, %cst_24 {dimension_numbers = #tpu.dot_dimension_numbers<[1], [0], [0], [1], [0, 0, 1, 1], [], []>} : vector<32x32xf32>, vector<32x34xf32>, vector<32x34xf32> -> vector<32x34xf32>
      %c2 = arith.constant 2 : index
      %c0_25 = arith.constant 0 : index
      %c0_26 = arith.constant 0 : index
      %22 = vector.load %arg1[%c2, %c0_25, %c0_26] : memref<4x32x32xf32, #tpu.memory_space<vmem>>, vector<1x32x32xf32>
      %23 = vector.shape_cast %22 : vector<1x32x32xf32> to vector<32x32xf32>
      %cst_27 = arith.constant dense<0.000000e+00> : vector<32x34xf32>
      %24 = tpu.matmul %23, %15, %cst_27 {dimension_numbers = #tpu.dot_dimension_numbers<[1], [0], [0], [1], [0, 0, 1, 1], [], []>} : vector<32x32xf32>, vector<32x34xf32>, vector<32x34xf32> -> vector<32x34xf32>
      %c3 = arith.constant 3 : index
      %c0_28 = arith.constant 0 : index
      %c0_29 = arith.constant 0 : index
      %25 = vector.load %arg1[%c3, %c0_28, %c0_29] : memref<4x32x32xf32, #tpu.memory_space<vmem>>, vector<1x32x32xf32>
      %26 = vector.shape_cast %25 : vector<1x32x32xf32> to vector<32x32xf32>
      %cst_30 = arith.constant dense<0.000000e+00> : vector<32x34xf32>
      %27 = tpu.matmul %26, %15, %cst_30 {dimension_numbers = #tpu.dot_dimension_numbers<[1], [0], [0], [1], [0, 0, 1, 1], [], []>} : vector<32x32xf32>, vector<32x34xf32>, vector<32x34xf32> -> vector<32x34xf32>
      %28 = tpu.concatenate %15, %18, %21, %24, %27 in 1 : vector<32x34xf32>, vector<32x34xf32>, vector<32x34xf32>, vector<32x34xf32>, vector<32x34xf32> -> vector<32x170xf32>
      %c0_31 = arith.constant 0 : index
      %c0_32 = arith.constant 0 : index
      %29 = vector.load %arg4[%c0_31, %c0_32] : memref<170x96xf32, #tpu.memory_space<vmem>>, vector<170x96xf32>
      %cst_33 = arith.constant dense<0.000000e+00> : vector<32x96xf32>
      %30 = tpu.matmul %28, %29, %cst_33 {dimension_numbers = #tpu.dot_dimension_numbers<[1], [0], [0], [1], [0, 0, 1, 1], [], []>} : vector<32x170xf32>, vector<170x96xf32>, vector<32x96xf32> -> vector<32x96xf32>
      %c0_34 = arith.constant 0 : index
      %c0_35 = arith.constant 0 : index
      %31 = vector.load %arg6[%c0_34, %c0_35] : memref<1x96xf32, #tpu.memory_space<vmem>>, vector<1x96xf32>
      %32 = vector.broadcast %31 : vector<1x96xf32> to vector<32x96xf32>
      %33 = arith.addf %30, %32 : vector<32x96xf32>
      %34 = vector.extract_strided_slice %33 {offsets = [0, 0], sizes = [32, 64], strides = [1, 1]} : vector<32x96xf32> to vector<32x64xf32>
      %35 = arith.negf %34 : vector<32x64xf32>
      %36 = math.exp %35 : vector<32x64xf32>
      %cst_36 = arith.constant 1.000000e+00 : f32
      %37 = vector.broadcast %cst_36 : f32 to vector<32x64xf32>
      %38 = arith.addf %37, %36 : vector<32x64xf32>
      %39 = arith.divf %37, %38 : vector<32x64xf32>
      %40 = vector.extract_strided_slice %39 {offsets = [0, 0], sizes = [32, 32], strides = [1, 1]} : vector<32x64xf32> to vector<32x32xf32>
      %41 = vector.extract_strided_slice %39 {offsets = [0, 32], sizes = [32, 32], strides = [1, 1]} : vector<32x64xf32> to vector<32x32xf32>
      %42 = vector.extract_strided_slice %33 {offsets = [0, 64], sizes = [32, 32], strides = [1, 1]} : vector<32x96xf32> to vector<32x32xf32>
      %43 = arith.mulf %40, %arg13 : vector<32x32xf32>
      %c0_37 = arith.constant 0 : index
      %c0_38 = arith.constant 0 : index
      %c0_39 = arith.constant 0 : index
      %44 = vector.load %arg1[%c0_37, %c0_38, %c0_39] : memref<4x32x32xf32, #tpu.memory_space<vmem>>, vector<1x32x32xf32>
      %45 = vector.shape_cast %44 : vector<1x32x32xf32> to vector<32x32xf32>
      %cst_40 = arith.constant dense<0.000000e+00> : vector<32x32xf32>
      %46 = tpu.matmul %45, %43, %cst_40 {dimension_numbers = #tpu.dot_dimension_numbers<[1], [0], [0], [1], [0, 0, 1, 1], [], []>} : vector<32x32xf32>, vector<32x32xf32>, vector<32x32xf32> -> vector<32x32xf32>
      %c1_41 = arith.constant 1 : index
      %c0_42 = arith.constant 0 : index
      %c0_43 = arith.constant 0 : index
      %47 = vector.load %arg1[%c1_41, %c0_42, %c0_43] : memref<4x32x32xf32, #tpu.memory_space<vmem>>, vector<1x32x32xf32>
      %48 = vector.shape_cast %47 : vector<1x32x32xf32> to vector<32x32xf32>
      %cst_44 = arith.constant dense<0.000000e+00> : vector<32x32xf32>
      %49 = tpu.matmul %48, %43, %cst_44 {dimension_numbers = #tpu.dot_dimension_numbers<[1], [0], [0], [1], [0, 0, 1, 1], [], []>} : vector<32x32xf32>, vector<32x32xf32>, vector<32x32xf32> -> vector<32x32xf32>
      %c2_45 = arith.constant 2 : index
      %c0_46 = arith.constant 0 : index
      %c0_47 = arith.constant 0 : index
      %50 = vector.load %arg1[%c2_45, %c0_46, %c0_47] : memref<4x32x32xf32, #tpu.memory_space<vmem>>, vector<1x32x32xf32>
      %51 = vector.shape_cast %50 : vector<1x32x32xf32> to vector<32x32xf32>
      %cst_48 = arith.constant dense<0.000000e+00> : vector<32x32xf32>
      %52 = tpu.matmul %51, %43, %cst_48 {dimension_numbers = #tpu.dot_dimension_numbers<[1], [0], [0], [1], [0, 0, 1, 1], [], []>} : vector<32x32xf32>, vector<32x32xf32>, vector<32x32xf32> -> vector<32x32xf32>
      %c3_49 = arith.constant 3 : index
      %c0_50 = arith.constant 0 : index
      %c0_51 = arith.constant 0 : index
      %53 = vector.load %arg1[%c3_49, %c0_50, %c0_51] : memref<4x32x32xf32, #tpu.memory_space<vmem>>, vector<1x32x32xf32>
      %54 = vector.shape_cast %53 : vector<1x32x32xf32> to vector<32x32xf32>
      %cst_52 = arith.constant dense<0.000000e+00> : vector<32x32xf32>
      %55 = tpu.matmul %54, %43, %cst_52 {dimension_numbers = #tpu.dot_dimension_numbers<[1], [0], [0], [1], [0, 0, 1, 1], [], []>} : vector<32x32xf32>, vector<32x32xf32>, vector<32x32xf32> -> vector<32x32xf32>
      %56 = tpu.concatenate %43, %46, %49, %52, %55 in 1 : vector<32x32xf32>, vector<32x32xf32>, vector<32x32xf32>, vector<32x32xf32>, vector<32x32xf32> -> vector<32x160xf32>
      %c0_53 = arith.constant 0 : index
      %c0_54 = arith.constant 0 : index
      %57 = vector.load %arg5[%c0_53, %c0_54] : memref<160x32xf32, #tpu.memory_space<vmem>>, vector<160x32xf32>
      %cst_55 = arith.constant dense<0.000000e+00> : vector<32x32xf32>
      %58 = tpu.matmul %56, %57, %cst_55 {dimension_numbers = #tpu.dot_dimension_numbers<[1], [0], [0], [1], [0, 0, 1, 1], [], []>} : vector<32x160xf32>, vector<160x32xf32>, vector<32x32xf32> -> vector<32x32xf32>
      %59 = arith.addf %42, %58 : vector<32x32xf32>
      %60 = math.tanh %59 : vector<32x32xf32>
      %61 = arith.mulf %41, %arg13 : vector<32x32xf32>
      %cst_56 = arith.constant 1.000000e+00 : f32
      %62 = vector.broadcast %cst_56 : f32 to vector<32x32xf32>
      %63 = arith.subf %62, %41 : vector<32x32xf32>
      %64 = arith.mulf %63, %60 : vector<32x32xf32>
      %65 = arith.addf %61, %64 : vector<32x32xf32>
      %66 = tpu.concatenate %65, %arg14 in 1 : vector<32x32xf32>, vector<32x32xf32> -> vector<32x64xf32>
      %c0_57 = arith.constant 0 : index
      %c0_58 = arith.constant 0 : index
      %c0_59 = arith.constant 0 : index
      %67 = vector.load %arg1[%c0_57, %c0_58, %c0_59] : memref<4x32x32xf32, #tpu.memory_space<vmem>>, vector<1x32x32xf32>
      %68 = vector.shape_cast %67 : vector<1x32x32xf32> to vector<32x32xf32>
      %cst_60 = arith.constant dense<0.000000e+00> : vector<32x64xf32>
      %69 = tpu.matmul %68, %66, %cst_60 {dimension_numbers = #tpu.dot_dimension_numbers<[1], [0], [0], [1], [0, 0, 1, 1], [], []>} : vector<32x32xf32>, vector<32x64xf32>, vector<32x64xf32> -> vector<32x64xf32>
      %c1_61 = arith.constant 1 : index
      %c0_62 = arith.constant 0 : index
      %c0_63 = arith.constant 0 : index
      %70 = vector.load %arg1[%c1_61, %c0_62, %c0_63] : memref<4x32x32xf32, #tpu.memory_space<vmem>>, vector<1x32x32xf32>
      %71 = vector.shape_cast %70 : vector<1x32x32xf32> to vector<32x32xf32>
      %cst_64 = arith.constant dense<0.000000e+00> : vector<32x64xf32>
      %72 = tpu.matmul %71, %66, %cst_64 {dimension_numbers = #tpu.dot_dimension_numbers<[1], [0], [0], [1], [0, 0, 1, 1], [], []>} : vector<32x32xf32>, vector<32x64xf32>, vector<32x64xf32> -> vector<32x64xf32>
      %c2_65 = arith.constant 2 : index
      %c0_66 = arith.constant 0 : index
      %c0_67 = arith.constant 0 : index
      %73 = vector.load %arg1[%c2_65, %c0_66, %c0_67] : memref<4x32x32xf32, #tpu.memory_space<vmem>>, vector<1x32x32xf32>
      %74 = vector.shape_cast %73 : vector<1x32x32xf32> to vector<32x32xf32>
      %cst_68 = arith.constant dense<0.000000e+00> : vector<32x64xf32>
      %75 = tpu.matmul %74, %66, %cst_68 {dimension_numbers = #tpu.dot_dimension_numbers<[1], [0], [0], [1], [0, 0, 1, 1], [], []>} : vector<32x32xf32>, vector<32x64xf32>, vector<32x64xf32> -> vector<32x64xf32>
      %c3_69 = arith.constant 3 : index
      %c0_70 = arith.constant 0 : index
      %c0_71 = arith.constant 0 : index
      %76 = vector.load %arg1[%c3_69, %c0_70, %c0_71] : memref<4x32x32xf32, #tpu.memory_space<vmem>>, vector<1x32x32xf32>
      %77 = vector.shape_cast %76 : vector<1x32x32xf32> to vector<32x32xf32>
      %cst_72 = arith.constant dense<0.000000e+00> : vector<32x64xf32>
      %78 = tpu.matmul %77, %66, %cst_72 {dimension_numbers = #tpu.dot_dimension_numbers<[1], [0], [0], [1], [0, 0, 1, 1], [], []>} : vector<32x32xf32>, vector<32x64xf32>, vector<32x64xf32> -> vector<32x64xf32>
      %79 = tpu.concatenate %66, %69, %72, %75, %78 in 1 : vector<32x64xf32>, vector<32x64xf32>, vector<32x64xf32>, vector<32x64xf32>, vector<32x64xf32> -> vector<32x320xf32>
      %c0_73 = arith.constant 0 : index
      %c0_74 = arith.constant 0 : index
      %80 = vector.load %arg7[%c0_73, %c0_74] : memref<320x96xf32, #tpu.memory_space<vmem>>, vector<320x96xf32>
      %cst_75 = arith.constant dense<0.000000e+00> : vector<32x96xf32>
      %81 = tpu.matmul %79, %80, %cst_75 {dimension_numbers = #tpu.dot_dimension_numbers<[1], [0], [0], [1], [0, 0, 1, 1], [], []>} : vector<32x320xf32>, vector<320x96xf32>, vector<32x96xf32> -> vector<32x96xf32>
      %c0_76 = arith.constant 0 : index
      %c0_77 = arith.constant 0 : index
      %82 = vector.load %arg9[%c0_76, %c0_77] : memref<1x96xf32, #tpu.memory_space<vmem>>, vector<1x96xf32>
      %83 = vector.broadcast %82 : vector<1x96xf32> to vector<32x96xf32>
      %84 = arith.addf %81, %83 : vector<32x96xf32>
      %85 = vector.extract_strided_slice %84 {offsets = [0, 0], sizes = [32, 64], strides = [1, 1]} : vector<32x96xf32> to vector<32x64xf32>
      %86 = arith.negf %85 : vector<32x64xf32>
      %87 = math.exp %86 : vector<32x64xf32>
      %cst_78 = arith.constant 1.000000e+00 : f32
      %88 = vector.broadcast %cst_78 : f32 to vector<32x64xf32>
      %89 = arith.addf %88, %87 : vector<32x64xf32>
      %90 = arith.divf %88, %89 : vector<32x64xf32>
      %91 = vector.extract_strided_slice %90 {offsets = [0, 0], sizes = [32, 32], strides = [1, 1]} : vector<32x64xf32> to vector<32x32xf32>
      %92 = vector.extract_strided_slice %90 {offsets = [0, 32], sizes = [32, 32], strides = [1, 1]} : vector<32x64xf32> to vector<32x32xf32>
      %93 = vector.extract_strided_slice %84 {offsets = [0, 64], sizes = [32, 32], strides = [1, 1]} : vector<32x96xf32> to vector<32x32xf32>
      %94 = arith.mulf %91, %arg14 : vector<32x32xf32>
      %c0_79 = arith.constant 0 : index
      %c0_80 = arith.constant 0 : index
      %c0_81 = arith.constant 0 : index
      %95 = vector.load %arg1[%c0_79, %c0_80, %c0_81] : memref<4x32x32xf32, #tpu.memory_space<vmem>>, vector<1x32x32xf32>
      %96 = vector.shape_cast %95 : vector<1x32x32xf32> to vector<32x32xf32>
      %cst_82 = arith.constant dense<0.000000e+00> : vector<32x32xf32>
      %97 = tpu.matmul %96, %94, %cst_82 {dimension_numbers = #tpu.dot_dimension_numbers<[1], [0], [0], [1], [0, 0, 1, 1], [], []>} : vector<32x32xf32>, vector<32x32xf32>, vector<32x32xf32> -> vector<32x32xf32>
      %c1_83 = arith.constant 1 : index
      %c0_84 = arith.constant 0 : index
      %c0_85 = arith.constant 0 : index
      %98 = vector.load %arg1[%c1_83, %c0_84, %c0_85] : memref<4x32x32xf32, #tpu.memory_space<vmem>>, vector<1x32x32xf32>
      %99 = vector.shape_cast %98 : vector<1x32x32xf32> to vector<32x32xf32>
      %cst_86 = arith.constant dense<0.000000e+00> : vector<32x32xf32>
      %100 = tpu.matmul %99, %94, %cst_86 {dimension_numbers = #tpu.dot_dimension_numbers<[1], [0], [0], [1], [0, 0, 1, 1], [], []>} : vector<32x32xf32>, vector<32x32xf32>, vector<32x32xf32> -> vector<32x32xf32>
      %c2_87 = arith.constant 2 : index
      %c0_88 = arith.constant 0 : index
      %c0_89 = arith.constant 0 : index
      %101 = vector.load %arg1[%c2_87, %c0_88, %c0_89] : memref<4x32x32xf32, #tpu.memory_space<vmem>>, vector<1x32x32xf32>
      %102 = vector.shape_cast %101 : vector<1x32x32xf32> to vector<32x32xf32>
      %cst_90 = arith.constant dense<0.000000e+00> : vector<32x32xf32>
      %103 = tpu.matmul %102, %94, %cst_90 {dimension_numbers = #tpu.dot_dimension_numbers<[1], [0], [0], [1], [0, 0, 1, 1], [], []>} : vector<32x32xf32>, vector<32x32xf32>, vector<32x32xf32> -> vector<32x32xf32>
      %c3_91 = arith.constant 3 : index
      %c0_92 = arith.constant 0 : index
      %c0_93 = arith.constant 0 : index
      %104 = vector.load %arg1[%c3_91, %c0_92, %c0_93] : memref<4x32x32xf32, #tpu.memory_space<vmem>>, vector<1x32x32xf32>
      %105 = vector.shape_cast %104 : vector<1x32x32xf32> to vector<32x32xf32>
      %cst_94 = arith.constant dense<0.000000e+00> : vector<32x32xf32>
      %106 = tpu.matmul %105, %94, %cst_94 {dimension_numbers = #tpu.dot_dimension_numbers<[1], [0], [0], [1], [0, 0, 1, 1], [], []>} : vector<32x32xf32>, vector<32x32xf32>, vector<32x32xf32> -> vector<32x32xf32>
      %107 = tpu.concatenate %94, %97, %100, %103, %106 in 1 : vector<32x32xf32>, vector<32x32xf32>, vector<32x32xf32>, vector<32x32xf32>, vector<32x32xf32> -> vector<32x160xf32>
      %c0_95 = arith.constant 0 : index
      %c0_96 = arith.constant 0 : index
      %108 = vector.load %arg8[%c0_95, %c0_96] : memref<160x32xf32, #tpu.memory_space<vmem>>, vector<160x32xf32>
      %cst_97 = arith.constant dense<0.000000e+00> : vector<32x32xf32>
      %109 = tpu.matmul %107, %108, %cst_97 {dimension_numbers = #tpu.dot_dimension_numbers<[1], [0], [0], [1], [0, 0, 1, 1], [], []>} : vector<32x160xf32>, vector<160x32xf32>, vector<32x32xf32> -> vector<32x32xf32>
      %110 = arith.addf %93, %109 : vector<32x32xf32>
      %111 = math.tanh %110 : vector<32x32xf32>
      %112 = arith.mulf %92, %arg14 : vector<32x32xf32>
      %cst_98 = arith.constant 1.000000e+00 : f32
      %113 = vector.broadcast %cst_98 : f32 to vector<32x32xf32>
      %114 = arith.subf %113, %92 : vector<32x32xf32>
      %115 = arith.mulf %114, %111 : vector<32x32xf32>
      %116 = arith.addf %112, %115 : vector<32x32xf32>
      %c0_99 = arith.constant 0 : index
      %117 = arith.index_cast %arg12 : i32 to index
      %c0_100 = arith.constant 0 : index
      %c0_101 = arith.constant 0 : index
      %118 = vector.load %arg10[%c0_99, %117, %c0_100, %c0_101] : memref<1x8x32x32xf32, #tpu.memory_space<vmem>>, vector<1x1x32x32xf32>
      %119 = vector.shape_cast %118 : vector<1x1x32x32xf32> to vector<32x32xf32>
      %120 = vector.shape_cast %116 : vector<32x32xf32> to vector<1x1x32x32xf32>
      tpu.vector_store %arg10[%c0_99, %117, %c0_100, %c0_101], %120 {strides = array<i32>} : memref<1x8x32x32xf32, #tpu.memory_space<vmem>>, vector<1x1x32x32xf32>,
      scf.yield %65, %116 : vector<32x32xf32>, vector<32x32xf32>
    }
    %c8_i32_6 = arith.constant 8 : i32
    %c0_7 = arith.constant 0 : index
    %c0_8 = arith.constant 0 : index
    %c0_9 = arith.constant 0 : index
    %c0_10 = arith.constant 0 : index
    %6 = vector.load %arg11[%c0_7, %c0_8, %c0_9, %c0_10] : memref<1x2x32x32xf32, #tpu.memory_space<vmem>>, vector<1x1x32x32xf32>
    %7 = vector.shape_cast %6 : vector<1x1x32x32xf32> to vector<32x32xf32>
    %8 = vector.shape_cast %5#0 : vector<32x32xf32> to vector<1x1x32x32xf32>
    tpu.vector_store %arg11[%c0_7, %c0_8, %c0_9, %c0_10], %8 {strides = array<i32>} : memref<1x2x32x32xf32, #tpu.memory_space<vmem>>, vector<1x1x32x32xf32>,
    %c0_11 = arith.constant 0 : index
    %c1_12 = arith.constant 1 : index
    %c0_13 = arith.constant 0 : index
    %c0_14 = arith.constant 0 : index
    %9 = vector.load %arg11[%c0_11, %c1_12, %c0_13, %c0_14] : memref<1x2x32x32xf32, #tpu.memory_space<vmem>>, vector<1x1x32x32xf32>
    %10 = vector.shape_cast %9 : vector<1x1x32x32xf32> to vector<32x32xf32>
    %11 = vector.shape_cast %5#1 : vector<32x32xf32> to vector<1x1x32x32xf32>
    tpu.vector_store %arg11[%c0_11, %c1_12, %c0_13, %c0_14], %11 {strides = array<i32>} : memref<1x2x32x32xf32, #tpu.memory_space<vmem>>, vector<1x1x32x32xf32>,
    return
  }
  func.func @transform_0(%arg0: i32) -> (i32, i32, i32) {
    %c0_i32 = arith.constant 0 : i32
    %c0_i32_0 = arith.constant 0 : i32
    %c0_i32_1 = arith.constant 0 : i32
    %c0_i32_2 = arith.constant 0 : i32
    return %c0_i32, %c0_i32_0, %c0_i32_1 : i32, i32, i32
  }
  func.func @transform_1(%arg0: i32) -> (i32, i32, i32, i32) {
    %c0_i32 = arith.constant 0 : i32
    %c0_i32_0 = arith.constant 0 : i32
    %c0_i32_1 = arith.constant 0 : i32
    %c0_i32_2 = arith.constant 0 : i32
    return %arg0, %c0_i32, %c0_i32_0, %c0_i32_1 : i32, i32, i32, i32
  }
  func.func @transform_2(%arg0: i32) -> (i32, i32, i32, i32) {
    %c0_i32 = arith.constant 0 : i32
    %c0_i32_0 = arith.constant 0 : i32
    %c0_i32_1 = arith.constant 0 : i32
    %c0_i32_2 = arith.constant 0 : i32
    return %arg0, %c0_i32, %c0_i32_0, %c0_i32_1 : i32, i32, i32, i32
  }
  func.func @transform_3(%arg0: i32) -> (i32, i32) {
    %c0_i32 = arith.constant 0 : i32
    %c0_i32_0 = arith.constant 0 : i32
    %c0_i32_1 = arith.constant 0 : i32
    return %c0_i32, %c0_i32_0 : i32, i32
  }
  func.func @transform_4(%arg0: i32) -> (i32, i32) {
    %c0_i32 = arith.constant 0 : i32
    %c0_i32_0 = arith.constant 0 : i32
    %c0_i32_1 = arith.constant 0 : i32
    return %c0_i32, %c0_i32_0 : i32, i32
  }
  func.func @transform_5(%arg0: i32) -> (i32, i32) {
    %c0_i32 = arith.constant 0 : i32
    %c0_i32_0 = arith.constant 0 : i32
    %c0_i32_1 = arith.constant 0 : i32
    return %c0_i32, %c0_i32_0 : i32, i32
  }
  func.func @transform_6(%arg0: i32) -> (i32, i32) {
    %c0_i32 = arith.constant 0 : i32
    %c0_i32_0 = arith.constant 0 : i32
    %c0_i32_1 = arith.constant 0 : i32
    return %c0_i32, %c0_i32_0 : i32, i32
  }
  func.func @transform_7(%arg0: i32) -> (i32, i32) {
    %c0_i32 = arith.constant 0 : i32
    %c0_i32_0 = arith.constant 0 : i32
    %c0_i32_1 = arith.constant 0 : i32
    return %c0_i32, %c0_i32_0 : i32, i32
  }
  func.func @transform_8(%arg0: i32) -> (i32, i32) {
    %c0_i32 = arith.constant 0 : i32
    %c0_i32_0 = arith.constant 0 : i32
    %c0_i32_1 = arith.constant 0 : i32
    return %c0_i32, %c0_i32_0 : i32, i32
  }
  func.func @transform_9(%arg0: i32) -> (i32, i32, i32, i32) {
    %c0_i32 = arith.constant 0 : i32
    %c0_i32_0 = arith.constant 0 : i32
    %c0_i32_1 = arith.constant 0 : i32
    %c0_i32_2 = arith.constant 0 : i32
    return %arg0, %c0_i32, %c0_i32_0, %c0_i32_1 : i32, i32, i32, i32
  }
  func.func @transform_10(%arg0: i32) -> (i32, i32, i32, i32) {
    %c0_i32 = arith.constant 0 : i32
    %c0_i32_0 = arith.constant 0 : i32
    %c0_i32_1 = arith.constant 0 : i32
    %c0_i32_2 = arith.constant 0 : i32
    return %arg0, %c0_i32, %c0_i32_0, %c0_i32_1 : i32, i32, i32, i32
  }
}

</mosaic_0001>

<llo_original>
// kernel: tpu_custom_call.1
$region0: #{tpu_custom_call.1}
  #allocation0 [shape = 'u32[]', space=smem, size = 0x4, offset = 0x4, fixed_abs, tag = 'smem constant byte address 0x4 - core index']
  #allocation1 [shape = 'u32[72,128]{1,0:T(1,128)}', space=vmem, size = 0x9000, scoped, tag = 'internal scratch']
  %s0 = inlined_call_operand.vmem [shape: f32[4,32,32], index: 0, kind: input, shape index: {}]
  %s1 = inlined_call_operand.vmem [shape: f32[2,8,32,2], index: 1, kind: input, shape index: {}]
  %s2 = inlined_call_operand.vmem [shape: f32[2,2,32,32], index: 2, kind: input, shape index: {}]
  %s3 = inlined_call_operand.vmem [shape: f32[170,96], index: 3, kind: input, shape index: {}]
  %s4 = inlined_call_operand.vmem [shape: f32[160,32], index: 4, kind: input, shape index: {}]
  %s5 = inlined_call_operand.vmem [shape: f32[1,96], index: 5, kind: input, shape index: {}]
  %s6 = inlined_call_operand.vmem [shape: f32[320,96], index: 6, kind: input, shape index: {}]
  %s7 = inlined_call_operand.vmem [shape: f32[160,32], index: 7, kind: input, shape index: {}]
  %s8 = inlined_call_operand.vmem [shape: f32[1,96], index: 8, kind: input, shape index: {}]
  %s9 = inlined_call_operand.hbm [shape: f32[2,8,32,32], index: 9, kind: output, shape index: {0}]
  %s10 = inlined_call_operand.hbm [shape: f32[2,2,32,32], index: 10, kind: output, shape index: {1}]
  %11 = xla_tuple %s9, %s10
  %s12 = sld [smem:[#allocation0]]
  $region84: #{tpu_custom_call.1} parent=0
    _
  %s14 = ssub.s32 1, %s12
  %s15 = scalar_select 0, %s14, %s12
  $region1: #{tpu_custom_call.1} parent=0
    #allocation2 [shape = 'u8[262144]{0}', space=vmem, size = 0x40000, scoped, tag = 'output window, operand 0']
    #allocation3 [shape = 's32[2]{0}', space=sflag, size = 0x8, scoped, tag = 'scoped memory for tpu_custom_call.1']
    #allocation4 [shape = 'u8[65536]{0}', space=vmem, size = 0x10000, scoped, tag = 'output window, operand 1']
    #allocation5 [shape = 's32[2]{0}', space=sflag, size = 0x8, scoped, tag = 'scoped memory for tpu_custom_call.1']
    %16 = vsyncpa [#allocation3], 0
    %s17 = scalar_lea.sflag [#allocation3], 1
    %18 = vsyncpa %s17, 0
    %19 = vsyncpa [#allocation5], 0
    %s20 = scalar_lea.sflag [#allocation5], 1
    %21 = vsyncpa %s20, 0
    loop: start=0, step=1, limit=4
    $region2: #{tpu_custom_call.1} parent=1 // loop_pre_header
      _
    $region3: #{tpu_custom_call.1} parent=1 // loop_header
      %s23 = sphi 0, %s27
      %p24 = scmp.ge.s32.totalorder %s23, 4
      %s31 = sphi 0, %s31
      %s33 = sphi 0, %s31
      %s34 = sphi 0, %s33
      %s48 = sphi 0, %s34
      %s54 = sphi 0, %s56
      %s57 = sphi 0, %s54
      %s58 = sphi 0, %s57
      %s74 = sphi 0, %s58
      %s80 = sphi 0, %s82
      %s83 = sphi 0, %s80
      %s84 = sphi 0, %s83
      %s100 = sphi 0, %s84
      %s104 = sphi 0, %s104
      %s106 = sphi 0, %s104
      %s107 = sphi 0, %s106
      %s121 = sphi 0, %s107
      %s125 = sphi 0, %s125
      %s127 = sphi 0, %s125
      %s128 = sphi 0, %s127
      %s142 = sphi 0, %s128
      %s146 = sphi 0, %s146
      %s148 = sphi 0, %s146
      %s149 = sphi 0, %s148
      %s163 = sphi 0, %s149
      %s167 = sphi 0, %s167
      %s169 = sphi 0, %s167
      %s170 = sphi 0, %s169
      %s184 = sphi 0, %s170
      %s188 = sphi 0, %s188
      %s190 = sphi 0, %s188
      %s191 = sphi 0, %s190
      %s205 = sphi 0, %s191
      %s209 = sphi 0, %s209
      %s211 = sphi 0, %s209
      %s212 = sphi 0, %s211
      %s226 = sphi 0, %s212
      %s232 = sphi 0, %s234
      %s235 = sphi 0, %s232
      %s236 = sphi 0, %s235
      %s252 = sphi 0, %s236
      %s258 = sphi 0, %s260
      %s261 = sphi 0, %s258
      %s262 = sphi 0, %s261
      %s278 = sphi 0, %s262
    $region4: #{tpu_custom_call.1} parent=1 // loop_header_branch
      %26 = sbr.rel (%p24) target = $region8
    $region5: #{tpu_custom_call.1} parent=1 // loop_body
      %s28 = ssub.s32 %s23, 1
      %s29 = ssub.s32 %s23, 2
      %s30 = sadd.s32 %s23, 1
      %s32 = sadd.s32 %s31, 1
      %p35 = scmp.eq.s32.totalorder %s23, 1
      %p36 = scmp.ne.s32.totalorder %s31, %s33
      %p37 = scmp.eq.s32.totalorder %s23, 0
      %p38 = por %p36, %p37
      %p39 = scmp.ne.s32.totalorder %s31, %s33
      %p40 = scmp.eq.s32.totalorder %s28, 1
      %p41 = por %p39, %p40
      %p42 = scmp.ne.s32.totalorder %s33, %s34
      %p43 = scmp.eq.s32.totalorder %s28, 0
      %p44 = por %p42, %p43
      %p45 = scmp.ne.s32.totalorder %s33, %s34
      %p46 = scmp.eq.s32.totalorder %s29, 1
      %p47 = por %p45, %p46
      %p49 = scmp.ne.s32.totalorder %s34, %s48
      %p50 = scmp.eq.s32.totalorder %s29, 0
      %p51 = por %p49, %p50
      %s52 = ssub.s32 %s23, %s30
      %p53 = scmp.eq.s32.totalorder %s52, 0
      %s55 = sadd.s32 %s54, 1
      %s56 = scalar_select %p53, %s54, %s55
      %p59 = pneg %p53
      %p60 = scmp.eq.s32.totalorder %s23, 1
      %p61 = por %p59, %p60
      %p62 = scmp.ne.s32.totalorder %s54, %s57
      %p63 = scmp.eq.s32.totalorder %s23, 0
      %p64 = por %p62, %p63
      %p65 = scmp.ne.s32.totalorder %s54, %s57
      %p66 = scmp.eq.s32.totalorder %s28, 1
      %p67 = por %p65, %p66
      %p68 = scmp.ne.s32.totalorder %s57, %s58
      %p69 = scmp.eq.s32.totalorder %s28, 0
      %p70 = por %p68, %p69
      %p71 = scmp.ne.s32.totalorder %s57, %s58
      %p72 = scmp.eq.s32.totalorder %s29, 1
      %p73 = por %p71, %p72
      %p75 = scmp.ne.s32.totalorder %s58, %s74
      %p76 = scmp.eq.s32.totalorder %s29, 0
      %p77 = por %p75, %p76
      %s78 = ssub.s32 %s23, %s30
      %p79 = scmp.eq.s32.totalorder %s78, 0
      %s81 = sadd.s32 %s80, 1
      %s82 = scalar_select %p79, %s80, %s81
      %p85 = pneg %p79
      %p86 = scmp.eq.s32.totalorder %s23, 1
      %p87 = por %p85, %p86
      %p88 = scmp.ne.s32.totalorder %s80, %s83
      %p89 = scmp.eq.s32.totalorder %s23, 0
      %p90 = por %p88, %p89
      %p91 = scmp.ne.s32.totalorder %s80, %s83
      %p92 = scmp.eq.s32.totalorder %s28, 1
      %p93 = por %p91, %p92
      %p94 = scmp.ne.s32.totalorder %s83, %s84
      %p95 = scmp.eq.s32.totalorder %s28, 0
      %p96 = por %p94, %p95
      %p97 = scmp.ne.s32.totalorder %s83, %s84
      %p98 = scmp.eq.s32.totalorder %s29, 1
      %p99 = por %p97, %p98
      %p101 = scmp.ne.s32.totalorder %s84, %s100
      %p102 = scmp.eq.s32.totalorder %s29, 0
      %p103 = por %p101, %p102
      %s105 = sadd.s32 %s104, 1
      %p108 = scmp.eq.s32.totalorder %s23, 1
      %p109 = scmp.ne.s32.totalorder %s104, %s106
      %p110 = scmp.eq.s32.totalorder %s23, 0
      %p111 = por %p109, %p110
      %p112 = scmp.ne.s32.totalorder %s104, %s106
      %p113 = scmp.eq.s32.totalorder %s28, 1
      %p114 = por %p112, %p113
      %p115 = scmp.ne.s32.totalorder %s106, %s107
      %p116 = scmp.eq.s32.totalorder %s28, 0
      %p117 = por %p115, %p116
      %p118 = scmp.ne.s32.totalorder %s106, %s107
      %p119 = scmp.eq.s32.totalorder %s29, 1
      %p120 = por %p118, %p119
      %p122 = scmp.ne.s32.totalorder %s107, %s121
      %p123 = scmp.eq.s32.totalorder %s29, 0
      %p124 = por %p122, %p123
      %s126 = sadd.s32 %s125, 1
      %p129 = scmp.eq.s32.totalorder %s23, 1
      %p130 = scmp.ne.s32.totalorder %s125, %s127
      %p131 = scmp.eq.s32.totalorder %s23, 0
      %p132 = por %p130, %p131
      %p133 = scmp.ne.s32.totalorder %s125, %s127
      %p134 = scmp.eq.s32.totalorder %s28, 1
      %p135 = por %p133, %p134
      %p136 = scmp.ne.s32.totalorder %s127, %s128
      %p137 = scmp.eq.s32.totalorder %s28, 0
      %p138 = por %p136, %p137
      %p139 = scmp.ne.s32.totalorder %s127, %s128
      %p140 = scmp.eq.s32.totalorder %s29, 1
      %p141 = por %p139, %p140
      %p143 = scmp.ne.s32.totalorder %s128, %s142
      %p144 = scmp.eq.s32.totalorder %s29, 0
      %p145 = por %p143, %p144
      %s147 = sadd.s32 %s146, 1
      %p150 = scmp.eq.s32.totalorder %s23, 1
      %p151 = scmp.ne.s32.totalorder %s146, %s148
      %p152 = scmp.eq.s32.totalorder %s23, 0
      %p153 = por %p151, %p152
      %p154 = scmp.ne.s32.totalorder %s146, %s148
      %p155 = scmp.eq.s32.totalorder %s28, 1
      %p156 = por %p154, %p155
      %p157 = scmp.ne.s32.totalorder %s148, %s149
      %p158 = scmp.eq.s32.totalorder %s28, 0
      %p159 = por %p157, %p158
      %p160 = scmp.ne.s32.totalorder %s148, %s149
      %p161 = scmp.eq.s32.totalorder %s29, 1
      %p162 = por %p160, %p161
      %p164 = scmp.ne.s32.totalorder %s149, %s163
      %p165 = scmp.eq.s32.totalorder %s29, 0
      %p166 = por %p164, %p165
      %s168 = sadd.s32 %s167, 1
      %p171 = scmp.eq.s32.totalorder %s23, 1
      %p172 = scmp.ne.s32.totalorder %s167, %s169
      %p173 = scmp.eq.s32.totalorder %s23, 0
      %p174 = por %p172, %p173
      %p175 = scmp.ne.s32.totalorder %s167, %s169
      %p176 = scmp.eq.s32.totalorder %s28, 1
      %p177 = por %p175, %p176
      %p178 = scmp.ne.s32.totalorder %s169, %s170
      %p179 = scmp.eq.s32.totalorder %s28, 0
      %p180 = por %p178, %p179
      %p181 = scmp.ne.s32.totalorder %s169, %s170
      %p182 = scmp.eq.s32.totalorder %s29, 1
      %p183 = por %p181, %p182
      %p185 = scmp.ne.s32.totalorder %s170, %s184
      %p186 = scmp.eq.s32.totalorder %s29, 0
      %p187 = por %p185, %p186
      %s189 = sadd.s32 %s188, 1
      %p192 = scmp.eq.s32.totalorder %s23, 1
      %p193 = scmp.ne.s32.totalorder %s188, %s190
      %p194 = scmp.eq.s32.totalorder %s23, 0
      %p195 = por %p193, %p194
      %p196 = scmp.ne.s32.totalorder %s188, %s190
      %p197 = scmp.eq.s32.totalorder %s28, 1
      %p198 = por %p196, %p197
      %p199 = scmp.ne.s32.totalorder %s190, %s191
      %p200 = scmp.eq.s32.totalorder %s28, 0
      %p201 = por %p199, %p200
      %p202 = scmp.ne.s32.totalorder %s190, %s191
      %p203 = scmp.eq.s32.totalorder %s29, 1
      %p204 = por %p202, %p203
      %p206 = scmp.ne.s32.totalorder %s191, %s205
      %p207 = scmp.eq.s32.totalorder %s29, 0
      %p208 = por %p206, %p207
      %s210 = sadd.s32 %s209, 1
      %p213 = scmp.eq.s32.totalorder %s23, 1
      %p214 = scmp.ne.s32.totalorder %s209, %s211
      %p215 = scmp.eq.s32.totalorder %s23, 0
      %p216 = por %p214, %p215
      %p217 = scmp.ne.s32.totalorder %s209, %s211
      %p218 = scmp.eq.s32.totalorder %s28, 1
      %p219 = por %p217, %p218
      %p220 = scmp.ne.s32.totalorder %s211, %s212
      %p221 = scmp.eq.s32.totalorder %s28, 0
      %p222 = por %p220, %p221
      %p223 = scmp.ne.s32.totalorder %s211, %s212
      %p224 = scmp.eq.s32.totalorder %s29, 1
      %p225 = por %p223, %p224
      %p227 = scmp.ne.s32.totalorder %s212, %s226
      %p228 = scmp.eq.s32.totalorder %s29, 0
      %p229 = por %p227, %p228
      %s230 = ssub.s32 %s23, %s30
      %p231 = scmp.eq.s32.totalorder %s230, 0
      %s233 = sadd.s32 %s232, 1
      %s234 = scalar_select %p231, %s232, %s233
      %p237 = pneg %p231
      %p238 = scmp.eq.s32.totalorder %s23, 1
      %p239 = por %p237, %p238
      %p240 = scmp.ne.s32.totalorder %s232, %s235
      %p241 = scmp.eq.s32.totalorder %s23, 0
      %p242 = por %p240, %p241
      %p243 = scmp.ne.s32.totalorder %s232, %s235
      %p244 = scmp.eq.s32.totalorder %s28, 1
      %p245 = por %p243, %p244
      %p246 = scmp.ne.s32.totalorder %s235, %s236
      %p247 = scmp.eq.s32.totalorder %s28, 0
      %p248 = por %p246, %p247
      %p249 = scmp.ne.s32.totalorder %s235, %s236
      %p250 = scmp.eq.s32.totalorder %s29, 1
      %p251 = por %p249, %p250
      %p253 = scmp.ne.s32.totalorder %s236, %s252
      %p254 = scmp.eq.s32.totalorder %s29, 0
      %p255 = por %p253, %p254
      %s256 = ssub.s32 %s23, %s30
      %p257 = scmp.eq.s32.totalorder %s256, 0
      %s259 = sadd.s32 %s258, 1
      %s260 = scalar_select %p257, %s258, %s259
      %p263 = pneg %p257
      %p264 = scmp.eq.s32.totalorder %s23, 1
      %p265 = por %p263, %p264
      %p266 = scmp.ne.s32.totalorder %s258, %s261
      %p267 = scmp.eq.s32.totalorder %s23, 0
      %p268 = por %p266, %p267
      %p269 = scmp.ne.s32.totalorder %s258, %s261
      %p270 = scmp.eq.s32.totalorder %s28, 1
      %p271 = por %p269, %p270
      %p272 = scmp.ne.s32.totalorder %s261, %s262
      %p273 = scmp.eq.s32.totalorder %s28, 0
      %p274 = por %p272, %p273
      %p275 = scmp.ne.s32.totalorder %s261, %s262
      %p276 = scmp.eq.s32.totalorder %s29, 1
      %p277 = por %p275, %p276
      %p279 = scmp.ne.s32.totalorder %s262, %s278
      %p280 = scmp.eq.s32.totalorder %s29, 0
      %p281 = por %p279, %p280
      %p282 = scmp.le.s32.totalorder 1, %s23
      %p283 = scmp.lt.s32.totalorder %s23, 3
      %p284 = pnand %p282, %p283
      %p285 = pneg %p284
      // Predicated region
      $region9: #{tpu_custom_call.1} parent=5 // pred_check
        _
      $region10: #{tpu_custom_call.1} parent=5 // pred_check_branch
        %287 = sbr.rel (%p284) target = $region12
      $region11: #{tpu_custom_call.1} parent=5 // pred_region
        %s288 = ssub.s32 %s23, 1
        // Predicated region
        $region13: #{tpu_custom_call.1} parent=11 // pred_check
          %p289 = pneg %p44
        $region14: #{tpu_custom_call.1} parent=11 // pred_check_branch
          %291 = sbr.rel (%p289) target = $region16
        $region15: #{tpu_custom_call.1} parent=11 // pred_region
          _
        $region16: #{tpu_custom_call.1} parent=11 // pred_fallthru
          _
        // Predicated region
        $region17: #{tpu_custom_call.1} parent=11 // pred_check
          %p292 = pneg %p117
        $region18: #{tpu_custom_call.1} parent=11 // pred_check_branch
          %294 = sbr.rel (%p292) target = $region20
        $region19: #{tpu_custom_call.1} parent=11 // pred_region
          _
        $region20: #{tpu_custom_call.1} parent=11 // pred_fallthru
          _
        // Predicated region
        $region21: #{tpu_custom_call.1} parent=11 // pred_check
          %p295 = pneg %p138
        $region22: #{tpu_custom_call.1} parent=11 // pred_check_branch
          %297 = sbr.rel (%p295) target = $region24
        $region23: #{tpu_custom_call.1} parent=11 // pred_region
          _
        $region24: #{tpu_custom_call.1} parent=11 // pred_fallthru
          _
        // Predicated region
        $region25: #{tpu_custom_call.1} parent=11 // pred_check
          %p298 = pneg %p159
        $region26: #{tpu_custom_call.1} parent=11 // pred_check_branch
          %300 = sbr.rel (%p298) target = $region28
        $region27: #{tpu_custom_call.1} parent=11 // pred_region
          _
        $region28: #{tpu_custom_call.1} parent=11 // pred_fallthru
          _
        // Predicated region
        $region29: #{tpu_custom_call.1} parent=11 // pred_check
          %p301 = pneg %p180
        $region30: #{tpu_custom_call.1} parent=11 // pred_check_branch
          %303 = sbr.rel (%p301) target = $region32
        $region31: #{tpu_custom_call.1} parent=11 // pred_region
          _
        $region32: #{tpu_custom_call.1} parent=11 // pred_fallthru
          _
        // Predicated region
        $region33: #{tpu_custom_call.1} parent=11 // pred_check
          %p304 = pneg %p201
        $region34: #{tpu_custom_call.1} parent=11 // pred_check_branch
          %306 = sbr.rel (%p304) target = $region36
        $region35: #{tpu_custom_call.1} parent=11 // pred_region
          _
        $region36: #{tpu_custom_call.1} parent=11 // pred_fallthru
          _
        // Predicated region
        $region37: #{tpu_custom_call.1} parent=11 // pred_check
          %p307 = pneg %p222
        $region38: #{tpu_custom_call.1} parent=11 // pred_check_branch
          %309 = sbr.rel (%p307) target = $region40
        $region39: #{tpu_custom_call.1} parent=11 // pred_region
          _
        $region40: #{tpu_custom_call.1} parent=11 // pred_fallthru
          _
      $region12: #{tpu_custom_call.1} parent=5 // pred_fallthru
        _
      %p310 = scmp.lt.s32.totalorder %s23, 2
      // Predicated region
      $region41: #{tpu_custom_call.1} parent=5 // pred_check
        %p311 = pneg %p310
      $region42: #{tpu_custom_call.1} parent=5 // pred_check_branch
        %313 = sbr.rel (%p311) target = $region44
      $region43: #{tpu_custom_call.1} parent=5 // pred_region
        // Predicated region
        $region45: #{tpu_custom_call.1} parent=43 // pred_check
          %p314 = pneg %p64
        $region46: #{tpu_custom_call.1} parent=43 // pred_check_branch
          %316 = sbr.rel (%p314) target = $region48
        $region47: #{tpu_custom_call.1} parent=43 // pred_region
          %p317 = scmp.lt.s32.totalorder %s23, 1
          %s318 = scalar_select %p317, %s23, 1
          %s319 = smul.addr %s318, 32
          %s320 = smul.addr %s319, 8
          %s321 = scalar_lea.vmem %s1, %s320
        $region48: #{tpu_custom_call.1} parent=43 // pred_fallthru
          _
        // Predicated region
        $region49: #{tpu_custom_call.1} parent=43 // pred_check
          %p322 = pneg %p90
        $region50: #{tpu_custom_call.1} parent=43 // pred_check_branch
          %324 = sbr.rel (%p322) target = $region52
        $region51: #{tpu_custom_call.1} parent=43 // pred_region
          %p325 = scmp.lt.s32.totalorder %s23, 1
          %s326 = scalar_select %p325, %s23, 1
          %s327 = smul.addr %s326, 8
          %s328 = smul.addr %s327, 8
          %s329 = scalar_lea.vmem %s2, %s328
        $region52: #{tpu_custom_call.1} parent=43 // pred_fallthru
          _
      $region44: #{tpu_custom_call.1} parent=5 // pred_fallthru
        _
      %p330 = scmp.le.s32.totalorder 1, %s23
      %p331 = scmp.lt.s32.totalorder %s23, 3
      %p332 = pnand %p330, %p331
      %p333 = pneg %p332
      // Predicated region
      $region53: #{tpu_custom_call.1} parent=5 // pred_check
        _
      $region54: #{tpu_custom_call.1} parent=5 // pred_check_branch
        %335 = sbr.rel (%p332) target = $region56
      $region55: #{tpu_custom_call.1} parent=5 // pred_region
        %s336 = ssub.s32 %s23, 1
        %p337 = pneg %p44
        %p338 = pneg %p41
        %p339 = scmp.lt.s32.totalorder %s28, 1
        %s340 = scalar_select %p339, %s28, 1
        %s341 = smul.addr %s340, 32
        %s342 = smul.addr %s341, 8
        %s343 = scalar_lea.vmem %s1, %s342
        %p344 = pneg %p70
        %p345 = pneg %p67
        %p346 = scmp.lt.s32.totalorder %s28, 1
        %s347 = scalar_select %p346, %s28, 1
        %s348 = smul.addr %s347, 8
        %s349 = smul.addr %s348, 8
        %s350 = scalar_lea.vmem %s2, %s349
        %p351 = pneg %p96
        %p352 = pneg %p93
        %p353 = pneg %p117
        %p354 = pneg %p114
        %p355 = pneg %p138
        %p356 = pneg %p135
        %p357 = pneg %p159
        %p358 = pneg %p156
        %p359 = pneg %p180
        %p360 = pneg %p177
        %p361 = pneg %p201
        %p362 = pneg %p198
        %p363 = pneg %p222
        %p364 = pneg %p219
        %p365 = pneg %p248
        %p366 = pneg %p245
        %s367 = sand.u32 %s235, 1
        %s368 = scalar_lea.sflag [#allocation3], %s367
        %s369 = sand.u32 %s235, 1
        %s370 = smul.addr %s369, 256
        %s371 = scalar_lea.vmem [#allocation2], %s370
        %p372 = pneg %p274
        %p373 = pneg %p271
        %s374 = sand.u32 %s261, 1
        %s375 = scalar_lea.sflag [#allocation5], %s374
        %s376 = sand.u32 %s261, 1
        %s377 = smul.addr %s376, 64
        %s378 = scalar_lea.vmem [#allocation4], %s377
        %p379 = scmp.lt.s32.totalorder %s28, 1
        %s380 = scalar_select %p379, %s28, 1
        %s381 = smul.addr %s380, 32
        %s382 = smul.addr %s381, 8
        %s383 = scalar_lea.vmem %s1, %s382
        %p384 = scmp.lt.s32.totalorder %s28, 1
        %s385 = scalar_select %p384, %s28, 1
        %s386 = smul.addr %s385, 8
        %s387 = smul.addr %s386, 8
        %s388 = scalar_lea.vmem %s2, %s387
        %v389 = vld [vmem:[%s388] sm:$0xff]
        %v390 = vld [vmem:[%s388 + $0x8] sm:$0xff]
        %v391 = vld [vmem:[%s388 + $0x10] sm:$0xff]
        %v392 = vld [vmem:[%s388 + $0x18] sm:$0xff]
        %s393 = scalar_lea.vmem %s388, 32
        %v394 = vld [vmem:[%s393] sm:$0xff]
        %v395 = vld [vmem:[%s393 + $0x8] sm:$0xff]
        %v396 = vld [vmem:[%s393 + $0x10] sm:$0xff]
        %v397 = vld [vmem:[%s393 + $0x18] sm:$0xff]
        loop: start=0, step=1, limit=8
        $region57: #{tpu_custom_call.1} parent=55 // loop_pre_header
          _
        $region58: #{tpu_custom_call.1} parent=55 // loop_header
          %s399 = sphi 0, %s403
          %p400 = scmp.ge.s32.totalorder %s399, 8
          %v404 = vphi %v389, %v1229
          %v405 = vphi %v390, %v1231
          %v406 = vphi %v391, %v1233
          %v407 = vphi %v392, %v1235
          %v408 = vphi %v394, %v1966
          %v409 = vphi %v395, %v1968
          %v410 = vphi %v396, %v1970
          %v411 = vphi %v397, %v1972
        $region59: #{tpu_custom_call.1} parent=55 // loop_header_branch
          %402 = sbr.rel (%p400) target = $region63
        $region60: #{tpu_custom_call.1} parent=55 // loop_body
          %s412 = smul.u32 %s399, 32
          %s413 = scalar_lea.vmem %s383, %s412
          %v414 = vld [vmem:[%s413] sm:$0xff]
          %v415 = vld [vmem:[%s413 + $0x8] sm:$0xff]
          %v416 = vld [vmem:[%s413 + $0x10] sm:$0xff]
          %v417 = vld [vmem:[%s413 + $0x18] sm:$0xff]
          %422 = vrot.lane.b32.xlu0 %v404, 2
          %v423 = vpop.permute.xlu0 %422
          %424 = vrot.lane.b32.xlu0 %v405, 2
          %v425 = vpop.permute.xlu0 %424
          %426 = vrot.lane.b32.xlu0 %v406, 2
          %v427 = vpop.permute.xlu0 %426
          %428 = vrot.lane.b32.xlu0 %v407, 2
          %v429 = vpop.permute.xlu0 %428
          %vm434 = vcmask 15360
          %v435 = vsel %vm434, %v414, %v423
          %v436 = vsel %vm434, %v415, %v425
          %v437 = vsel %vm434, %v416, %v427
          %v438 = vsel %vm434, %v417, %v429
          %v439 = vld [vmem:[%s0] sm:$0xff]
          %v440 = vld [vmem:[%s0 + $0x8] sm:$0xff]
          %v441 = vld [vmem:[%s0 + $0x10] sm:$0xff]
          %v442 = vld [vmem:[%s0 + $0x18] sm:$0xff]
          %vm443 = vcmask 261120
          %v445 = vsel %vm443, %v439, 0
          %v448 = vsel %vm443, %v440, 0
          %v451 = vsel %vm443, %v441, 0
          %v454 = vsel %vm443, %v442, 0
          %456 = vmatpush.msra.mxu0 0.0
          %457 = vmatpush.msra.mxu0 0.0
          %458 = vmatpush.msra.mxu0 0.0
          %459 = vmatpush.msra.mxu0 0.0
          %460 = vmatpush.msra.mxu0 0.0
          %461 = vmatpush.msra.mxu0 0.0
          %462 = vmatpush.msra.mxu0 0.0
          %463 = vmatpush.msra.mxu0 0.0
          %464 = vmatpush.msra.mxu0 0.0
          %465 = vmatpush.msra.mxu0 0.0
          %466 = vmatpush.msra.mxu0 0.0
          %467 = vmatpush.msra.mxu0 0.0
          %468 = vmatpush.msra.mxu0 %v438
          %469 = vmatpush.msra.mxu0 %v437
          %470 = vmatpush.msra.mxu0 %v436
          %471 = vmatpush.msra.mxu0 %v435
          %472 = vmatmul.f32.gmra.mxu0 %v445
          %v473 = vpop.f32.mrf.mxu0
          %v474 = vadd.f32 0.0, %v473
          %475 = vmatmul.f32.gmra.mxu0 %v448
          %v476 = vpop.f32.mrf.mxu0
          %v477 = vadd.f32 0.0, %v476
          %478 = vmatmul.f32.gmra.mxu0 %v451
          %v479 = vpop.f32.mrf.mxu0
          %v480 = vadd.f32 0.0, %v479
          %481 = vmatmul.f32.gmra.mxu0 %v454
          %v482 = vpop.f32.mrf.mxu0
          %v483 = vadd.f32 0.0, %v482
          %484 = vdwg.mxu0
          %s485 = scalar_lea.vmem %s0, 32
          %v486 = vld [vmem:[%s485] sm:$0xff]
          %v487 = vld [vmem:[%s485 + $0x8] sm:$0xff]
          %v488 = vld [vmem:[%s485 + $0x10] sm:$0xff]
          %v489 = vld [vmem:[%s485 + $0x18] sm:$0xff]
          %v491 = vsel %vm443, %v486, 0
          %v494 = vsel %vm443, %v487, 0
          %v497 = vsel %vm443, %v488, 0
          %v500 = vsel %vm443, %v489, 0
          %502 = vmatpush.msra.mxu0 0.0
          %503 = vmatpush.msra.mxu0 0.0
          %504 = vmatpush.msra.mxu0 0.0
          %505 = vmatpush.msra.mxu0 0.0
          %506 = vmatpush.msra.mxu0 0.0
          %507 = vmatpush.msra.mxu0 0.0
          %508 = vmatpush.msra.mxu0 0.0
          %509 = vmatpush.msra.mxu0 0.0
          %510 = vmatpush.msra.mxu0 0.0
          %511 = vmatpush.msra.mxu0 0.0
          %512 = vmatpush.msra.mxu0 0.0
          %513 = vmatpush.msra.mxu0 0.0
          %514 = vmatpush.msra.mxu0 %v438
          %515 = vmatpush.msra.mxu0 %v437
          %516 = vmatpush.msra.mxu0 %v436
          %517 = vmatpush.msra.mxu0 %v435
          %518 = vmatmul.f32.gmra.mxu0 %v491
          %v519 = vpop.f32.mrf.mxu0
          %v520 = vadd.f32 0.0, %v519
          %521 = vmatmul.f32.gmra.mxu0 %v494
          %v522 = vpop.f32.mrf.mxu0
          %v523 = vadd.f32 0.0, %v522
          %524 = vmatmul.f32.gmra.mxu0 %v497
          %v525 = vpop.f32.mrf.mxu0
          %v526 = vadd.f32 0.0, %v525
          %527 = vmatmul.f32.gmra.mxu0 %v500
          %v528 = vpop.f32.mrf.mxu0
          %v529 = vadd.f32 0.0, %v528
          %530 = vdwg.mxu0
          %s531 = scalar_lea.vmem %s0, 64
          %v532 = vld [vmem:[%s531] sm:$0xff]
          %v533 = vld [vmem:[%s531 + $0x8] sm:$0xff]
          %v534 = vld [vmem:[%s531 + $0x10] sm:$0xff]
          %v535 = vld [vmem:[%s531 + $0x18] sm:$0xff]
          %v537 = vsel %vm443, %v532, 0
          %v540 = vsel %vm443, %v533, 0
          %v543 = vsel %vm443, %v534, 0
          %v546 = vsel %vm443, %v535, 0
          %548 = vmatpush.msra.mxu0 0.0
          %549 = vmatpush.msra.mxu0 0.0
          %550 = vmatpush.msra.mxu0 0.0
          %551 = vmatpush.msra.mxu0 0.0
          %552 = vmatpush.msra.mxu0 0.0
          %553 = vmatpush.msra.mxu0 0.0
          %554 = vmatpush.msra.mxu0 0.0
          %555 = vmatpush.msra.mxu0 0.0
          %556 = vmatpush.msra.mxu0 0.0
          %557 = vmatpush.msra.mxu0 0.0
          %558 = vmatpush.msra.mxu0 0.0
          %559 = vmatpush.msra.mxu0 0.0
          %560 = vmatpush.msra.mxu0 %v438
          %561 = vmatpush.msra.mxu0 %v437
          %562 = vmatpush.msra.mxu0 %v436
          %563 = vmatpush.msra.mxu0 %v435
          %564 = vmatmul.f32.gmra.mxu0 %v537
          %v565 = vpop.f32.mrf.mxu0
          %v566 = vadd.f32 0.0, %v565
          %567 = vmatmul.f32.gmra.mxu0 %v540
          %v568 = vpop.f32.mrf.mxu0
          %v569 = vadd.f32 0.0, %v568
          %570 = vmatmul.f32.gmra.mxu0 %v543
          %v571 = vpop.f32.mrf.mxu0
          %v572 = vadd.f32 0.0, %v571
          %573 = vmatmul.f32.gmra.mxu0 %v546
          %v574 = vpop.f32.mrf.mxu0
          %v575 = vadd.f32 0.0, %v574
          %576 = vdwg.mxu0
          %s577 = scalar_lea.vmem %s0, 96
          %v578 = vld [vmem:[%s577] sm:$0xff]
          %v579 = vld [vmem:[%s577 + $0x8] sm:$0xff]
          %v580 = vld [vmem:[%s577 + $0x10] sm:$0xff]
          %v581 = vld [vmem:[%s577 + $0x18] sm:$0xff]
          %v583 = vsel %vm443, %v578, 0
          %v586 = vsel %vm443, %v579, 0
          %v589 = vsel %vm443, %v580, 0
          %v592 = vsel %vm443, %v581, 0
          %594 = vmatpush.msra.mxu0 0.0
          %595 = vmatpush.msra.mxu0 0.0
          %596 = vmatpush.msra.mxu0 0.0
          %597 = vmatpush.msra.mxu0 0.0
          %598 = vmatpush.msra.mxu0 0.0
          %599 = vmatpush.msra.mxu0 0.0
          %600 = vmatpush.msra.mxu0 0.0
          %601 = vmatpush.msra.mxu0 0.0
          %602 = vmatpush.msra.mxu0 0.0
          %603 = vmatpush.msra.mxu0 0.0
          %604 = vmatpush.msra.mxu0 0.0
          %605 = vmatpush.msra.mxu0 0.0
          %606 = vmatpush.msra.mxu0 %v438
          %607 = vmatpush.msra.mxu0 %v437
          %608 = vmatpush.msra.mxu0 %v436
          %609 = vmatpush.msra.mxu0 %v435
          %610 = vmatmul.f32.gmra.mxu0 %v583
          %v611 = vpop.f32.mrf.mxu0
          %v612 = vadd.f32 0.0, %v611
          %613 = vmatmul.f32.gmra.mxu0 %v586
          %v614 = vpop.f32.mrf.mxu0
          %v615 = vadd.f32 0.0, %v614
          %616 = vmatmul.f32.gmra.mxu0 %v589
          %v617 = vpop.f32.mrf.mxu0
          %v618 = vadd.f32 0.0, %v617
          %619 = vmatmul.f32.gmra.mxu0 %v592
          %v620 = vpop.f32.mrf.mxu0
          %v621 = vadd.f32 0.0, %v620
          %622 = vdwg.mxu0
          %627 = vrot.lane.b32.xlu0 %v474, 34
          %v628 = vpop.permute.xlu0 %627
          %629 = vrot.lane.b32.xlu0 %v477, 34
          %v630 = vpop.permute.xlu0 %629
          %631 = vrot.lane.b32.xlu0 %v480, 34
          %v632 = vpop.permute.xlu0 %631
          %633 = vrot.lane.b32.xlu0 %v483, 34
          %v634 = vpop.permute.xlu0 %633
          %643 = vrot.lane.b32.xlu0 %v520, 68
          %v644 = vpop.permute.xlu0 %643
          %645 = vrot.lane.b32.xlu0 %v523, 68
          %v646 = vpop.permute.xlu0 %645
          %647 = vrot.lane.b32.xlu0 %v526, 68
          %v648 = vpop.permute.xlu0 %647
          %649 = vrot.lane.b32.xlu0 %v529, 68
          %v650 = vpop.permute.xlu0 %649
          %659 = vrot.lane.b32.xlu0 %v566, 102
          %v660 = vpop.permute.xlu0 %659
          %661 = vrot.lane.b32.xlu0 %v569, 102
          %v662 = vpop.permute.xlu0 %661
          %663 = vrot.lane.b32.xlu0 %v572, 102
          %v664 = vpop.permute.xlu0 %663
          %665 = vrot.lane.b32.xlu0 %v575, 102
          %v666 = vpop.permute.xlu0 %665
          %675 = vrot.lane.b32.xlu0 %v612, 8
          %v676 = vpop.permute.xlu0 %675
          %677 = vrot.lane.b32.xlu0 %v615, 8
          %v678 = vpop.permute.xlu0 %677
          %679 = vrot.lane.b32.xlu0 %v618, 8
          %v680 = vpop.permute.xlu0 %679
          %681 = vrot.lane.b32.xlu0 %v621, 8
          %v682 = vpop.permute.xlu0 %681
          %vm687 = vcmask 277504
          %v688 = vsel %vm687, %v435, %v628
          %v689 = vsel %vm687, %v436, %v630
          %v690 = vsel %vm687, %v437, %v632
          %v691 = vsel %vm687, %v438, %v634
          %vm692 = vcmask 556032
          %v693 = vsel %vm692, %v688, %v644
          %v694 = vsel %vm692, %v689, %v646
          %v695 = vsel %vm692, %v690, %v648
          %v696 = vsel %vm692, %v691, %v650
          %vm697 = vcmask 834560
          %v698 = vsel %vm697, %v693, %v660
          %v699 = vsel %vm697, %v694, %v662
          %v700 = vsel %vm697, %v695, %v664
          %v701 = vsel %vm697, %v696, %v666
          %vm702 = vcmask 64512
          %v703 = vsel %vm702, %v660, %v676
          %v704 = vsel %vm702, %v662, %v678
          %v705 = vsel %vm702, %v664, %v680
          %v706 = vsel %vm702, %v666, %v682
          %v707 = vld [vmem:[%s3] sm:$0xff]
          %v708 = vld [vmem:[%s3 + $0x8] sm:$0xff]
          %v709 = vld [vmem:[%s3 + $0x10] sm:$0xff]
          %v710 = vld [vmem:[%s3 + $0x18] sm:$0xff]
          %v711 = vld [vmem:[%s3 + $0x20] sm:$0xff]
          %v712 = vld [vmem:[%s3 + $0x28] sm:$0xff]
          %v713 = vld [vmem:[%s3 + $0x30] sm:$0xff]
          %v714 = vld [vmem:[%s3 + $0x38] sm:$0xff]
          %v715 = vld [vmem:[%s3 + $0x40] sm:$0xff]
          %v716 = vld [vmem:[%s3 + $0x48] sm:$0xff]
          %v717 = vld [vmem:[%s3 + $0x50] sm:$0xff]
          %v718 = vld [vmem:[%s3 + $0x58] sm:$0xff]
          %v719 = vld [vmem:[%s3 + $0x60] sm:$0xff]
          %v720 = vld [vmem:[%s3 + $0x68] sm:$0xff]
          %v721 = vld [vmem:[%s3 + $0x70] sm:$0xff]
          %v722 = vld [vmem:[%s3 + $0x78] sm:$0xff]
          %v723 = vld [vmem:[%s3 + $0x80] sm:$0xff]
          %v724 = vld [vmem:[%s3 + $0x88] sm:$0xff]
          %v725 = vld [vmem:[%s3 + $0x90] sm:$0xff]
          %v726 = vld [vmem:[%s3 + $0x98] sm:$0xff]
          %v727 = vld [vmem:[%s3 + $0xa0] sm:$0xff]
          %v728 = vld [vmem:[%s3 + $0xa8] sm:$0x3]
          %v729 = vld [vmem:[%s5] sm:$0x1]
          %v731 = vperm.slane %v729, 0
          %vm733 = vcmask 343040
          %v735 = vsel %vm733, %v703, 0
          %v738 = vsel %vm733, %v704, 0
          %v741 = vsel %vm733, %v705, 0
          %v744 = vsel %vm733, %v706, 0
          %vm746 = vcmask 1041408
          %v748 = vsel %vm746, %v728, 0
          %750 = vmatpush.msra.mxu0 %v722
          %751 = vmatpush.msra.mxu0 %v721
          %752 = vmatpush.msra.mxu0 %v720
          %753 = vmatpush.msra.mxu0 %v719
          %754 = vmatpush.msra.mxu0 %v718
          %755 = vmatpush.msra.mxu0 %v717
          %756 = vmatpush.msra.mxu0 %v716
          %757 = vmatpush.msra.mxu0 %v715
          %758 = vmatpush.msra.mxu0 %v714
          %759 = vmatpush.msra.mxu0 %v713
          %760 = vmatpush.msra.mxu0 %v712
          %761 = vmatpush.msra.mxu0 %v711
          %762 = vmatpush.msra.mxu0 %v710
          %763 = vmatpush.msra.mxu0 %v709
          %764 = vmatpush.msra.mxu0 %v708
          %765 = vmatpush.msra.mxu0 %v707
          %766 = vmatmul.f32.gmra.mxu0 %v698
          %v767 = vpop.f32.mrf.mxu0
          %v768 = vadd.f32 %v731, %v767
          %769 = vmatmul.f32.gmra.mxu0 %v699
          %v770 = vpop.f32.mrf.mxu0
          %v771 = vadd.f32 %v731, %v770
          %772 = vmatmul.f32.gmra.mxu0 %v700
          %v773 = vpop.f32.mrf.mxu0
          %v774 = vadd.f32 %v731, %v773
          %775 = vmatmul.f32.gmra.mxu0 %v701
          %v776 = vpop.f32.mrf.mxu0
          %v777 = vadd.f32 %v731, %v776
          %778 = vdwg.mxu0
          %779 = vmatpush.msra.mxu0 0.0
          %780 = vmatpush.msra.mxu0 0.0
          %781 = vmatpush.msra.mxu0 0.0
          %782 = vmatpush.msra.mxu0 0.0
          %783 = vmatpush.msra.mxu0 0.0
          %784 = vmatpush.msra.mxu0 0.0
          %785 = vmatpush.msra.mxu0 0.0
          %786 = vmatpush.msra.mxu0 0.0
          %787 = vmatpush.msra.mxu0 0.0
          %788 = vmatpush.msra.mxu0 0.0
          %789 = vmatpush.msra.mxu0 %v748
          %790 = vmatpush.msra.mxu0 %v727
          %791 = vmatpush.msra.mxu0 %v726
          %792 = vmatpush.msra.mxu0 %v725
          %793 = vmatpush.msra.mxu0 %v724
          %794 = vmatpush.msra.mxu0 %v723
          %795 = vmatmul.f32.gmra.mxu0 %v735
          %v796 = vpop.f32.mrf.mxu0
          %v797 = vadd.f32 %v768, %v796
          %798 = vmatmul.f32.gmra.mxu0 %v738
          %v799 = vpop.f32.mrf.mxu0
          %v800 = vadd.f32 %v771, %v799
          %801 = vmatmul.f32.gmra.mxu0 %v741
          %v802 = vpop.f32.mrf.mxu0
          %v803 = vadd.f32 %v774, %v802
          %804 = vmatmul.f32.gmra.mxu0 %v744
          %v805 = vpop.f32.mrf.mxu0
          %v806 = vadd.f32 %v777, %v805
          %807 = vdwg.mxu0
          %v808 = vxor.u32 %v797, 2147483648
          %v809 = vxor.u32 %v800, 2147483648
          %v810 = vxor.u32 %v803, 2147483648
          %v811 = vxor.u32 %v806, 2147483648
          %v812 = vmul.f32 %v808, 1.442695
          %v813 = vpow.pop %v812
          %v814 = vmul.f32 %v809, 1.442695
          %v815 = vpow.pop %v814
          %v816 = vmul.f32 %v810, 1.442695
          %v817 = vpow.pop %v816
          %v818 = vmul.f32 %v811, 1.442695
          %v819 = vpow.pop %v818
          %v820 = vadd.f32 %v813, 1.0
          %v821 = vadd.f32 %v815, 1.0
          %v822 = vadd.f32 %v817, 1.0
          %v823 = vadd.f32 %v819, 1.0
          %v824 = vrcp.pop %v820
          %v825 = vmul.f32 %v820, %v824
          %v826 = vsub.f32 1.0, %v825
          %v827 = vmul.f32 %v824, %v826
          %v828 = vadd.f32 %v824, %v827
          %vm829 = vweird.f32 %v820
          %vm830 = vweird.f32 %v824
          %vm831 = vmor %vm829, %vm830
          %v832 = vsel %vm831, %v824, %v828
          %v833 = vand.u32 2147483647, %v820
          %vm834 = vcmp.eq.f32.partialorder %v833, 8.507059e+37
          %v835 = vand.u32 %v820, 2147483648
          %v836 = vor.u32 1.1754944e-38, %v835
          %v837 = vsel %vm834, %v836, %v832
          %v838 = vmul.f32 1.0, %v837
          %v839 = vrcp.pop %v821
          %v840 = vmul.f32 %v821, %v839
          %v841 = vsub.f32 1.0, %v840
          %v842 = vmul.f32 %v839, %v841
          %v843 = vadd.f32 %v839, %v842
          %vm844 = vweird.f32 %v821
          %vm845 = vweird.f32 %v839
          %vm846 = vmor %vm844, %vm845
          %v847 = vsel %vm846, %v839, %v843
          %v848 = vand.u32 2147483647, %v821
          %vm849 = vcmp.eq.f32.partialorder %v848, 8.507059e+37
          %v850 = vand.u32 %v821, 2147483648
          %v851 = vor.u32 1.1754944e-38, %v850
          %v852 = vsel %vm849, %v851, %v847
          %v853 = vmul.f32 1.0, %v852
          %v854 = vrcp.pop %v822
          %v855 = vmul.f32 %v822, %v854
          %v856 = vsub.f32 1.0, %v855
          %v857 = vmul.f32 %v854, %v856
          %v858 = vadd.f32 %v854, %v857
          %vm859 = vweird.f32 %v822
          %vm860 = vweird.f32 %v854
          %vm861 = vmor %vm859, %vm860
          %v862 = vsel %vm861, %v854, %v858
          %v863 = vand.u32 2147483647, %v822
          %vm864 = vcmp.eq.f32.partialorder %v863, 8.507059e+37
          %v865 = vand.u32 %v822, 2147483648
          %v866 = vor.u32 1.1754944e-38, %v865
          %v867 = vsel %vm864, %v866, %v862
          %v868 = vmul.f32 1.0, %v867
          %v869 = vrcp.pop %v823
          %v870 = vmul.f32 %v823, %v869
          %v871 = vsub.f32 1.0, %v870
          %v872 = vmul.f32 %v869, %v871
          %v873 = vadd.f32 %v869, %v872
          %vm874 = vweird.f32 %v823
          %vm875 = vweird.f32 %v869
          %vm876 = vmor %vm874, %vm875
          %v877 = vsel %vm876, %v869, %v873
          %v878 = vand.u32 2147483647, %v823
          %vm879 = vcmp.eq.f32.partialorder %v878, 8.507059e+37
          %v880 = vand.u32 %v823, 2147483648
          %v881 = vor.u32 1.1754944e-38, %v880
          %v882 = vsel %vm879, %v881, %v877
          %v883 = vmul.f32 1.0, %v882
          %v884 = vmul.f32 %v838, %v404
          %v885 = vmul.f32 %v853, %v405
          %v886 = vmul.f32 %v868, %v406
          %v887 = vmul.f32 %v883, %v407
          %888 = vmatpush.msra.mxu0 0.0
          %889 = vmatpush.msra.mxu0 0.0
          %890 = vmatpush.msra.mxu0 0.0
          %891 = vmatpush.msra.mxu0 0.0
          %892 = vmatpush.msra.mxu0 0.0
          %893 = vmatpush.msra.mxu0 0.0
          %894 = vmatpush.msra.mxu0 0.0
          %895 = vmatpush.msra.mxu0 0.0
          %896 = vmatpush.msra.mxu0 0.0
          %897 = vmatpush.msra.mxu0 0.0
          %898 = vmatpush.msra.mxu0 0.0
          %899 = vmatpush.msra.mxu0 0.0
          %900 = vmatpush.msra.mxu0 %v887
          %901 = vmatpush.msra.mxu0 %v886
          %902 = vmatpush.msra.mxu0 %v885
          %903 = vmatpush.msra.mxu0 %v884
          %904 = vmatmul.f32.gmra.mxu0 %v445
          %v905 = vpop.f32.mrf.mxu0
          %v906 = vadd.f32 0.0, %v905
          %907 = vmatmul.f32.gmra.mxu0 %v448
          %v908 = vpop.f32.mrf.mxu0
          %v909 = vadd.f32 0.0, %v908
          %910 = vmatmul.f32.gmra.mxu0 %v451
          %v911 = vpop.f32.mrf.mxu0
          %v912 = vadd.f32 0.0, %v911
          %913 = vmatmul.f32.gmra.mxu0 %v454
          %v914 = vpop.f32.mrf.mxu0
          %v915 = vadd.f32 0.0, %v914
          %916 = vdwg.mxu0
          %917 = vmatpush.msra.mxu0 0.0
          %918 = vmatpush.msra.mxu0 0.0
          %919 = vmatpush.msra.mxu0 0.0
          %920 = vmatpush.msra.mxu0 0.0
          %921 = vmatpush.msra.mxu0 0.0
          %922 = vmatpush.msra.mxu0 0.0
          %923 = vmatpush.msra.mxu0 0.0
          %924 = vmatpush.msra.mxu0 0.0
          %925 = vmatpush.msra.mxu0 0.0
          %926 = vmatpush.msra.mxu0 0.0
          %927 = vmatpush.msra.mxu0 0.0
          %928 = vmatpush.msra.mxu0 0.0
          %929 = vmatpush.msra.mxu0 %v887
          %930 = vmatpush.msra.mxu0 %v886
          %931 = vmatpush.msra.mxu0 %v885
          %932 = vmatpush.msra.mxu0 %v884
          %933 = vmatmul.f32.gmra.mxu0 %v491
          %v934 = vpop.f32.mrf.mxu0
          %v935 = vadd.f32 0.0, %v934
          %936 = vmatmul.f32.gmra.mxu0 %v494
          %v937 = vpop.f32.mrf.mxu0
          %v938 = vadd.f32 0.0, %v937
          %939 = vmatmul.f32.gmra.mxu0 %v497
          %v940 = vpop.f32.mrf.mxu0
          %v941 = vadd.f32 0.0, %v940
          %942 = vmatmul.f32.gmra.mxu0 %v500
          %v943 = vpop.f32.mrf.mxu0
          %v944 = vadd.f32 0.0, %v943
          %945 = vdwg.mxu0
          %946 = vmatpush.msra.mxu0 0.0
          %947 = vmatpush.msra.mxu0 0.0
          %948 = vmatpush.msra.mxu0 0.0
          %949 = vmatpush.msra.mxu0 0.0
          %950 = vmatpush.msra.mxu0 0.0
          %951 = vmatpush.msra.mxu0 0.0
          %952 = vmatpush.msra.mxu0 0.0
          %953 = vmatpush.msra.mxu0 0.0
          %954 = vmatpush.msra.mxu0 0.0
          %955 = vmatpush.msra.mxu0 0.0
          %956 = vmatpush.msra.mxu0 0.0
          %957 = vmatpush.msra.mxu0 0.0
          %958 = vmatpush.msra.mxu0 %v887
          %959 = vmatpush.msra.mxu0 %v886
          %960 = vmatpush.msra.mxu0 %v885
          %961 = vmatpush.msra.mxu0 %v884
          %962 = vmatmul.f32.gmra.mxu0 %v537
          %v963 = vpop.f32.mrf.mxu0
          %v964 = vadd.f32 0.0, %v963
          %965 = vmatmul.f32.gmra.mxu0 %v540
          %v966 = vpop.f32.mrf.mxu0
          %v967 = vadd.f32 0.0, %v966
          %968 = vmatmul.f32.gmra.mxu0 %v543
          %v969 = vpop.f32.mrf.mxu0
          %v970 = vadd.f32 0.0, %v969
          %971 = vmatmul.f32.gmra.mxu0 %v546
          %v972 = vpop.f32.mrf.mxu0
          %v973 = vadd.f32 0.0, %v972
          %974 = vdwg.mxu0
          %975 = vmatpush.msra.mxu0 0.0
          %976 = vmatpush.msra.mxu0 0.0
          %977 = vmatpush.msra.mxu0 0.0
          %978 = vmatpush.msra.mxu0 0.0
          %979 = vmatpush.msra.mxu0 0.0
          %980 = vmatpush.msra.mxu0 0.0
          %981 = vmatpush.msra.mxu0 0.0
          %982 = vmatpush.msra.mxu0 0.0
          %983 = vmatpush.msra.mxu0 0.0
          %984 = vmatpush.msra.mxu0 0.0
          %985 = vmatpush.msra.mxu0 0.0
          %986 = vmatpush.msra.mxu0 0.0
          %987 = vmatpush.msra.mxu0 %v887
          %988 = vmatpush.msra.mxu0 %v886
          %989 = vmatpush.msra.mxu0 %v885
          %990 = vmatpush.msra.mxu0 %v884
          %991 = vmatmul.f32.gmra.mxu0 %v583
          %v992 = vpop.f32.mrf.mxu0
          %v993 = vadd.f32 0.0, %v992
          %994 = vmatmul.f32.gmra.mxu0 %v586
          %v995 = vpop.f32.mrf.mxu0
          %v996 = vadd.f32 0.0, %v995
          %997 = vmatmul.f32.gmra.mxu0 %v589
          %v998 = vpop.f32.mrf.mxu0
          %v999 = vadd.f32 0.0, %v998
          %1000 = vmatmul.f32.gmra.mxu0 %v592
          %v1001 = vpop.f32.mrf.mxu0
          %v1002 = vadd.f32 0.0, %v1001
          %1003 = vdwg.mxu0
          %1008 = vrot.lane.b32.xlu0 %v906, 32
          %v1009 = vpop.permute.xlu0 %1008
          %1010 = vrot.lane.b32.xlu0 %v909, 32
          %v1011 = vpop.permute.xlu0 %1010
          %1012 = vrot.lane.b32.xlu0 %v912, 32
          %v1013 = vpop.permute.xlu0 %1012
          %1014 = vrot.lane.b32.xlu0 %v915, 32
          %v1015 = vpop.permute.xlu0 %1014
          %1024 = vrot.lane.b32.xlu0 %v935, 64
          %v1025 = vpop.permute.xlu0 %1024
          %1026 = vrot.lane.b32.xlu0 %v938, 64
          %v1027 = vpop.permute.xlu0 %1026
          %1028 = vrot.lane.b32.xlu0 %v941, 64
          %v1029 = vpop.permute.xlu0 %1028
          %1030 = vrot.lane.b32.xlu0 %v944, 64
          %v1031 = vpop.permute.xlu0 %1030
          %1040 = vrot.lane.b32.xlu0 %v964, 96
          %v1041 = vpop.permute.xlu0 %1040
          %1042 = vrot.lane.b32.xlu0 %v967, 96
          %v1043 = vpop.permute.xlu0 %1042
          %1044 = vrot.lane.b32.xlu0 %v970, 96
          %v1045 = vpop.permute.xlu0 %1044
          %1046 = vrot.lane.b32.xlu0 %v973, 96
          %v1047 = vpop.permute.xlu0 %1046
          %v1052 = vsel %vm443, %v884, %v1009
          %v1053 = vsel %vm443, %v885, %v1011
          %v1054 = vsel %vm443, %v886, %v1013
          %v1055 = vsel %vm443, %v887, %v1015
          %vm1056 = vcmask 523264
          %v1057 = vsel %vm1056, %v1052, %v1025
          %v1058 = vsel %vm1056, %v1053, %v1027
          %v1059 = vsel %vm1056, %v1054, %v1029
          %v1060 = vsel %vm1056, %v1055, %v1031
          %vm1061 = vcmask 785408
          %v1062 = vsel %vm1061, %v1057, %v1041
          %v1063 = vsel %vm1061, %v1058, %v1043
          %v1064 = vsel %vm1061, %v1059, %v1045
          %v1065 = vsel %vm1061, %v1060, %v1047
          %v1066 = vld [vmem:[%s4] sm:$0xff]
          %v1067 = vld [vmem:[%s4 + $0x8] sm:$0xff]
          %v1068 = vld [vmem:[%s4 + $0x10] sm:$0xff]
          %v1069 = vld [vmem:[%s4 + $0x18] sm:$0xff]
          %v1070 = vld [vmem:[%s4 + $0x20] sm:$0xff]
          %v1071 = vld [vmem:[%s4 + $0x28] sm:$0xff]
          %v1072 = vld [vmem:[%s4 + $0x30] sm:$0xff]
          %v1073 = vld [vmem:[%s4 + $0x38] sm:$0xff]
          %v1074 = vld [vmem:[%s4 + $0x40] sm:$0xff]
          %v1075 = vld [vmem:[%s4 + $0x48] sm:$0xff]
          %v1076 = vld [vmem:[%s4 + $0x50] sm:$0xff]
          %v1077 = vld [vmem:[%s4 + $0x58] sm:$0xff]
          %v1078 = vld [vmem:[%s4 + $0x60] sm:$0xff]
          %v1079 = vld [vmem:[%s4 + $0x68] sm:$0xff]
          %v1080 = vld [vmem:[%s4 + $0x70] sm:$0xff]
          %v1081 = vld [vmem:[%s4 + $0x78] sm:$0xff]
          %v1082 = vld [vmem:[%s4 + $0x80] sm:$0xff]
          %v1083 = vld [vmem:[%s4 + $0x88] sm:$0xff]
          %v1084 = vld [vmem:[%s4 + $0x90] sm:$0xff]
          %v1085 = vld [vmem:[%s4 + $0x98] sm:$0xff]
          %v1087 = vsel %vm443, %v993, 0
          %v1090 = vsel %vm443, %v996, 0
          %v1093 = vsel %vm443, %v999, 0
          %v1096 = vsel %vm443, %v1002, 0
          %1098 = vmatpush.msra.mxu0 %v1081
          %1099 = vmatpush.msra.mxu0 %v1080
          %1100 = vmatpush.msra.mxu0 %v1079
          %1101 = vmatpush.msra.mxu0 %v1078
          %1102 = vmatpush.msra.mxu0 %v1077
          %1103 = vmatpush.msra.mxu0 %v1076
          %1104 = vmatpush.msra.mxu0 %v1075
          %1105 = vmatpush.msra.mxu0 %v1074
          %1106 = vmatpush.msra.mxu0 %v1073
          %1107 = vmatpush.msra.mxu0 %v1072
          %1108 = vmatpush.msra.mxu0 %v1071
          %1109 = vmatpush.msra.mxu0 %v1070
          %1110 = vmatpush.msra.mxu0 %v1069
          %1111 = vmatpush.msra.mxu0 %v1068
          %1112 = vmatpush.msra.mxu0 %v1067
          %1113 = vmatpush.msra.mxu0 %v1066
          %1114 = vmatmul.f32.gmra.mxu0 %v1062
          %v1115 = vpop.f32.mrf.mxu0
          %v1116 = vadd.f32 0.0, %v1115
          %1117 = vmatmul.f32.gmra.mxu0 %v1063
          %v1118 = vpop.f32.mrf.mxu0
          %v1119 = vadd.f32 0.0, %v1118
          %1120 = vmatmul.f32.gmra.mxu0 %v1064
          %v1121 = vpop.f32.mrf.mxu0
          %v1122 = vadd.f32 0.0, %v1121
          %1123 = vmatmul.f32.gmra.mxu0 %v1065
          %v1124 = vpop.f32.mrf.mxu0
          %v1125 = vadd.f32 0.0, %v1124
          %1126 = vdwg.mxu0
          %1127 = vmatpush.msra.mxu0 0.0
          %1128 = vmatpush.msra.mxu0 0.0
          %1129 = vmatpush.msra.mxu0 0.0
          %1130 = vmatpush.msra.mxu0 0.0
          %1131 = vmatpush.msra.mxu0 0.0
          %1132 = vmatpush.msra.mxu0 0.0
          %1133 = vmatpush.msra.mxu0 0.0
          %1134 = vmatpush.msra.mxu0 0.0
          %1135 = vmatpush.msra.mxu0 0.0
          %1136 = vmatpush.msra.mxu0 0.0
          %1137 = vmatpush.msra.mxu0 0.0
          %1138 = vmatpush.msra.mxu0 0.0
          %1139 = vmatpush.msra.mxu0 %v1085
          %1140 = vmatpush.msra.mxu0 %v1084
          %1141 = vmatpush.msra.mxu0 %v1083
          %1142 = vmatpush.msra.mxu0 %v1082
          %1143 = vmatmul.f32.gmra.mxu0 %v1087
          %v1144 = vpop.f32.mrf.mxu0
          %v1145 = vadd.f32 %v1116, %v1144
          %1146 = vmatmul.f32.gmra.mxu0 %v1090
          %v1147 = vpop.f32.mrf.mxu0
          %v1148 = vadd.f32 %v1119, %v1147
          %1149 = vmatmul.f32.gmra.mxu0 %v1093
          %v1150 = vpop.f32.mrf.mxu0
          %v1151 = vadd.f32 %v1122, %v1150
          %1152 = vmatmul.f32.gmra.mxu0 %v1096
          %v1153 = vpop.f32.mrf.mxu0
          %v1154 = vadd.f32 %v1125, %v1153
          %1155 = vdwg.mxu0
          %1160 = vrot.lane.b32.xlu0 %v1145, 64
          %v1161 = vpop.permute.xlu0 %1160
          %1162 = vrot.lane.b32.xlu0 %v1148, 64
          %v1163 = vpop.permute.xlu0 %1162
          %1164 = vrot.lane.b32.xlu0 %v1151, 64
          %v1165 = vpop.permute.xlu0 %1164
          %1166 = vrot.lane.b32.xlu0 %v1154, 64
          %v1167 = vpop.permute.xlu0 %1166
          %v1172 = vadd.f32 %v797, %v1161
          %v1173 = vadd.f32 %v800, %v1163
          %v1174 = vadd.f32 %v803, %v1165
          %v1175 = vadd.f32 %v806, %v1167
          %v1176 = vtanh.pop %v1172
          %v1177 = vtanh.pop %v1173
          %v1178 = vtanh.pop %v1174
          %v1179 = vtanh.pop %v1175
          %1180 = vrot.lane.b32.xlu0 %v404, 32
          %v1181 = vpop.permute.xlu0 %1180
          %1182 = vrot.lane.b32.xlu0 %v405, 32
          %v1183 = vpop.permute.xlu0 %1182
          %1184 = vrot.lane.b32.xlu0 %v406, 32
          %v1185 = vpop.permute.xlu0 %1184
          %1186 = vrot.lane.b32.xlu0 %v407, 32
          %v1187 = vpop.permute.xlu0 %1186
          %v1192 = vmul.f32 %v838, %v1181
          %v1193 = vmul.f32 %v853, %v1183
          %v1194 = vmul.f32 %v868, %v1185
          %v1195 = vmul.f32 %v883, %v1187
          %v1196 = vsub.f32 1.0, %v838
          %v1197 = vsub.f32 1.0, %v853
          %v1198 = vsub.f32 1.0, %v868
          %v1199 = vsub.f32 1.0, %v883
          %1204 = vrot.lane.b32.xlu0 %v1176, 96
          %v1205 = vpop.permute.xlu0 %1204
          %1206 = vrot.lane.b32.xlu0 %v1177, 96
          %v1207 = vpop.permute.xlu0 %1206
          %1208 = vrot.lane.b32.xlu0 %v1178, 96
          %v1209 = vpop.permute.xlu0 %1208
          %1210 = vrot.lane.b32.xlu0 %v1179, 96
          %v1211 = vpop.permute.xlu0 %1210
          %v1216 = vmul.f32 %v1196, %v1205
          %v1217 = vmul.f32 %v1197, %v1207
          %v1218 = vmul.f32 %v1198, %v1209
          %v1219 = vmul.f32 %v1199, %v1211
          %v1220 = vadd.f32 %v1192, %v1216
          %v1221 = vadd.f32 %v1193, %v1217
          %v1222 = vadd.f32 %v1194, %v1218
          %v1223 = vadd.f32 %v1195, %v1219
          %1228 = vrot.lane.b32.xlu0 %v1220, 96
          %v1229 = vpop.permute.xlu0 %1228
          %1230 = vrot.lane.b32.xlu0 %v1221, 96
          %v1231 = vpop.permute.xlu0 %1230
          %1232 = vrot.lane.b32.xlu0 %v1222, 96
          %v1233 = vpop.permute.xlu0 %1232
          %1234 = vrot.lane.b32.xlu0 %v1223, 96
          %v1235 = vpop.permute.xlu0 %1234
          %1244 = vrot.lane.b32.xlu0 %v408, 32
          %v1245 = vpop.permute.xlu0 %1244
          %1246 = vrot.lane.b32.xlu0 %v409, 32
          %v1247 = vpop.permute.xlu0 %1246
          %1248 = vrot.lane.b32.xlu0 %v410, 32
          %v1249 = vpop.permute.xlu0 %1248
          %1250 = vrot.lane.b32.xlu0 %v411, 32
          %v1251 = vpop.permute.xlu0 %1250
          %v1256 = vsel %vm443, %v1229, %v1245
          %v1257 = vsel %vm443, %v1231, %v1247
          %v1258 = vsel %vm443, %v1233, %v1249
          %v1259 = vsel %vm443, %v1235, %v1251
          %1260 = vmatpush.msra.mxu0 0.0
          %1261 = vmatpush.msra.mxu0 0.0
          %1262 = vmatpush.msra.mxu0 0.0
          %1263 = vmatpush.msra.mxu0 0.0
          %1264 = vmatpush.msra.mxu0 0.0
          %1265 = vmatpush.msra.mxu0 0.0
          %1266 = vmatpush.msra.mxu0 0.0
          %1267 = vmatpush.msra.mxu0 0.0
          %1268 = vmatpush.msra.mxu0 0.0
          %1269 = vmatpush.msra.mxu0 0.0
          %1270 = vmatpush.msra.mxu0 0.0
          %1271 = vmatpush.msra.mxu0 0.0
          %1272 = vmatpush.msra.mxu0 %v1259
          %1273 = vmatpush.msra.mxu0 %v1258
          %1274 = vmatpush.msra.mxu0 %v1257
          %1275 = vmatpush.msra.mxu0 %v1256
          %1276 = vmatmul.f32.gmra.mxu0 %v445
          %v1277 = vpop.f32.mrf.mxu0
          %v1278 = vadd.f32 0.0, %v1277
          %1279 = vmatmul.f32.gmra.mxu0 %v448
          %v1280 = vpop.f32.mrf.mxu0
          %v1281 = vadd.f32 0.0, %v1280
          %1282 = vmatmul.f32.gmra.mxu0 %v451
          %v1283 = vpop.f32.mrf.mxu0
          %v1284 = vadd.f32 0.0, %v1283
          %1285 = vmatmul.f32.gmra.mxu0 %v454
          %v1286 = vpop.f32.mrf.mxu0
          %v1287 = vadd.f32 0.0, %v1286
          %1288 = vdwg.mxu0
          %1289 = vmatpush.msra.mxu0 0.0
          %1290 = vmatpush.msra.mxu0 0.0
          %1291 = vmatpush.msra.mxu0 0.0
          %1292 = vmatpush.msra.mxu0 0.0
          %1293 = vmatpush.msra.mxu0 0.0
          %1294 = vmatpush.msra.mxu0 0.0
          %1295 = vmatpush.msra.mxu0 0.0
          %1296 = vmatpush.msra.mxu0 0.0
          %1297 = vmatpush.msra.mxu0 0.0
          %1298 = vmatpush.msra.mxu0 0.0
          %1299 = vmatpush.msra.mxu0 0.0
          %1300 = vmatpush.msra.mxu0 0.0
          %1301 = vmatpush.msra.mxu0 %v1259
          %1302 = vmatpush.msra.mxu0 %v1258
          %1303 = vmatpush.msra.mxu0 %v1257
          %1304 = vmatpush.msra.mxu0 %v1256
          %1305 = vmatmul.f32.gmra.mxu0 %v491
          %v1306 = vpop.f32.mrf.mxu0
          %v1307 = vadd.f32 0.0, %v1306
          %1308 = vmatmul.f32.gmra.mxu0 %v494
          %v1309 = vpop.f32.mrf.mxu0
          %v1310 = vadd.f32 0.0, %v1309
          %1311 = vmatmul.f32.gmra.mxu0 %v497
          %v1312 = vpop.f32.mrf.mxu0
          %v1313 = vadd.f32 0.0, %v1312
          %1314 = vmatmul.f32.gmra.mxu0 %v500
          %v1315 = vpop.f32.mrf.mxu0
          %v1316 = vadd.f32 0.0, %v1315
          %1317 = vdwg.mxu0
          %1318 = vmatpush.msra.mxu0 0.0
          %1319 = vmatpush.msra.mxu0 0.0
          %1320 = vmatpush.msra.mxu0 0.0
          %1321 = vmatpush.msra.mxu0 0.0
          %1322 = vmatpush.msra.mxu0 0.0
          %1323 = vmatpush.msra.mxu0 0.0
          %1324 = vmatpush.msra.mxu0 0.0
          %1325 = vmatpush.msra.mxu0 0.0
          %1326 = vmatpush.msra.mxu0 0.0
          %1327 = vmatpush.msra.mxu0 0.0
          %1328 = vmatpush.msra.mxu0 0.0
          %1329 = vmatpush.msra.mxu0 0.0
          %1330 = vmatpush.msra.mxu0 %v1259
          %1331 = vmatpush.msra.mxu0 %v1258
          %1332 = vmatpush.msra.mxu0 %v1257
          %1333 = vmatpush.msra.mxu0 %v1256
          %1334 = vmatmul.f32.gmra.mxu0 %v537
          %v1335 = vpop.f32.mrf.mxu0
          %v1336 = vadd.f32 0.0, %v1335
          %1337 = vmatmul.f32.gmra.mxu0 %v540
          %v1338 = vpop.f32.mrf.mxu0
          %v1339 = vadd.f32 0.0, %v1338
          %1340 = vmatmul.f32.gmra.mxu0 %v543
          %v1341 = vpop.f32.mrf.mxu0
          %v1342 = vadd.f32 0.0, %v1341
          %1343 = vmatmul.f32.gmra.mxu0 %v546
          %v1344 = vpop.f32.mrf.mxu0
          %v1345 = vadd.f32 0.0, %v1344
          %1346 = vdwg.mxu0
          %1347 = vmatpush.msra.mxu0 0.0
          %1348 = vmatpush.msra.mxu0 0.0
          %1349 = vmatpush.msra.mxu0 0.0
          %1350 = vmatpush.msra.mxu0 0.0
          %1351 = vmatpush.msra.mxu0 0.0
          %1352 = vmatpush.msra.mxu0 0.0
          %1353 = vmatpush.msra.mxu0 0.0
          %1354 = vmatpush.msra.mxu0 0.0
          %1355 = vmatpush.msra.mxu0 0.0
          %1356 = vmatpush.msra.mxu0 0.0
          %1357 = vmatpush.msra.mxu0 0.0
          %1358 = vmatpush.msra.mxu0 0.0
          %1359 = vmatpush.msra.mxu0 %v1259
          %1360 = vmatpush.msra.mxu0 %v1258
          %1361 = vmatpush.msra.mxu0 %v1257
          %1362 = vmatpush.msra.mxu0 %v1256
          %1363 = vmatmul.f32.gmra.mxu0 %v583
          %v1364 = vpop.f32.mrf.mxu0
          %v1365 = vadd.f32 0.0, %v1364
          %1366 = vmatmul.f32.gmra.mxu0 %v586
          %v1367 = vpop.f32.mrf.mxu0
          %v1368 = vadd.f32 0.0, %v1367
          %1369 = vmatmul.f32.gmra.mxu0 %v589
          %v1370 = vpop.f32.mrf.mxu0
          %v1371 = vadd.f32 0.0, %v1370
          %1372 = vmatmul.f32.gmra.mxu0 %v592
          %v1373 = vpop.f32.mrf.mxu0
          %v1374 = vadd.f32 0.0, %v1373
          %1375 = vdwg.mxu0
          %1380 = vrot.lane.b32.xlu0 %v1278, 64
          %v1381 = vpop.permute.xlu0 %1380
          %1382 = vrot.lane.b32.xlu0 %v1281, 64
          %v1383 = vpop.permute.xlu0 %1382
          %1384 = vrot.lane.b32.xlu0 %v1284, 64
          %v1385 = vpop.permute.xlu0 %1384
          %1386 = vrot.lane.b32.xlu0 %v1287, 64
          %v1387 = vpop.permute.xlu0 %1386
          %1396 = vrot.lane.b32.xlu0 %v1336, 64
          %v1397 = vpop.permute.xlu0 %1396
          %1398 = vrot.lane.b32.xlu0 %v1339, 64
          %v1399 = vpop.permute.xlu0 %1398
          %1400 = vrot.lane.b32.xlu0 %v1342, 64
          %v1401 = vpop.permute.xlu0 %1400
          %1402 = vrot.lane.b32.xlu0 %v1345, 64
          %v1403 = vpop.permute.xlu0 %1402
          %v1408 = vsel %vm1056, %v1256, %v1381
          %v1409 = vsel %vm1056, %v1257, %v1383
          %v1410 = vsel %vm1056, %v1258, %v1385
          %v1411 = vsel %vm1056, %v1259, %v1387
          %v1412 = vsel %vm1056, %v1307, %v1397
          %v1413 = vsel %vm1056, %v1310, %v1399
          %v1414 = vsel %vm1056, %v1313, %v1401
          %v1415 = vsel %vm1056, %v1316, %v1403
          %v1416 = vld [vmem:[%s6] sm:$0xff]
          %v1417 = vld [vmem:[%s6 + $0x8] sm:$0xff]
          %v1418 = vld [vmem:[%s6 + $0x10] sm:$0xff]
          %v1419 = vld [vmem:[%s6 + $0x18] sm:$0xff]
          %v1420 = vld [vmem:[%s6 + $0x20] sm:$0xff]
          %v1421 = vld [vmem:[%s6 + $0x28] sm:$0xff]
          %v1422 = vld [vmem:[%s6 + $0x30] sm:$0xff]
          %v1423 = vld [vmem:[%s6 + $0x38] sm:$0xff]
          %v1424 = vld [vmem:[%s6 + $0x40] sm:$0xff]
          %v1425 = vld [vmem:[%s6 + $0x48] sm:$0xff]
          %v1426 = vld [vmem:[%s6 + $0x50] sm:$0xff]
          %v1427 = vld [vmem:[%s6 + $0x58] sm:$0xff]
          %v1428 = vld [vmem:[%s6 + $0x60] sm:$0xff]
          %v1429 = vld [vmem:[%s6 + $0x68] sm:$0xff]
          %v1430 = vld [vmem:[%s6 + $0x70] sm:$0xff]
          %v1431 = vld [vmem:[%s6 + $0x78] sm:$0xff]
          %v1432 = vld [vmem:[%s6 + $0x80] sm:$0xff]
          %v1433 = vld [vmem:[%s6 + $0x88] sm:$0xff]
          %v1434 = vld [vmem:[%s6 + $0x90] sm:$0xff]
          %v1435 = vld [vmem:[%s6 + $0x98] sm:$0xff]
          %v1436 = vld [vmem:[%s6 + $0xa0] sm:$0xff]
          %v1437 = vld [vmem:[%s6 + $0xa8] sm:$0xff]
          %v1438 = vld [vmem:[%s6 + $0xb0] sm:$0xff]
          %v1439 = vld [vmem:[%s6 + $0xb8] sm:$0xff]
          %v1440 = vld [vmem:[%s6 + $0xc0] sm:$0xff]
          %v1441 = vld [vmem:[%s6 + $0xc8] sm:$0xff]
          %v1442 = vld [vmem:[%s6 + $0xd0] sm:$0xff]
          %v1443 = vld [vmem:[%s6 + $0xd8] sm:$0xff]
          %v1444 = vld [vmem:[%s6 + $0xe0] sm:$0xff]
          %v1445 = vld [vmem:[%s6 + $0xe8] sm:$0xff]
          %v1446 = vld [vmem:[%s6 + $0xf0] sm:$0xff]
          %v1447 = vld [vmem:[%s6 + $0xf8] sm:$0xff]
          %v1448 = vld [vmem:[%s6 + $0x100] sm:$0xff]
          %v1449 = vld [vmem:[%s6 + $0x108] sm:$0xff]
          %v1450 = vld [vmem:[%s6 + $0x110] sm:$0xff]
          %v1451 = vld [vmem:[%s6 + $0x118] sm:$0xff]
          %v1452 = vld [vmem:[%s6 + $0x120] sm:$0xff]
          %v1453 = vld [vmem:[%s6 + $0x128] sm:$0xff]
          %v1454 = vld [vmem:[%s6 + $0x130] sm:$0xff]
          %v1455 = vld [vmem:[%s6 + $0x138] sm:$0xff]
          %v1456 = vld [vmem:[%s8] sm:$0x1]
          %v1458 = vperm.slane %v1456, 0
          %v1461 = vsel %vm1056, %v1365, 0
          %v1464 = vsel %vm1056, %v1368, 0
          %v1467 = vsel %vm1056, %v1371, 0
          %v1470 = vsel %vm1056, %v1374, 0
          %1472 = vmatpush.msra.mxu0 %v1431
          %1473 = vmatpush.msra.mxu0 %v1430
          %1474 = vmatpush.msra.mxu0 %v1429
          %1475 = vmatpush.msra.mxu0 %v1428
          %1476 = vmatpush.msra.mxu0 %v1427
          %1477 = vmatpush.msra.mxu0 %v1426
          %1478 = vmatpush.msra.mxu0 %v1425
          %1479 = vmatpush.msra.mxu0 %v1424
          %1480 = vmatpush.msra.mxu0 %v1423
          %1481 = vmatpush.msra.mxu0 %v1422
          %1482 = vmatpush.msra.mxu0 %v1421
          %1483 = vmatpush.msra.mxu0 %v1420
          %1484 = vmatpush.msra.mxu0 %v1419
          %1485 = vmatpush.msra.mxu0 %v1418
          %1486 = vmatpush.msra.mxu0 %v1417
          %1487 = vmatpush.msra.mxu0 %v1416
          %1488 = vmatmul.f32.gmra.mxu0 %v1408
          %v1489 = vpop.f32.mrf.mxu0
          %v1490 = vadd.f32 %v1458, %v1489
          %1491 = vmatmul.f32.gmra.mxu0 %v1409
          %v1492 = vpop.f32.mrf.mxu0
          %v1493 = vadd.f32 %v1458, %v1492
          %1494 = vmatmul.f32.gmra.mxu0 %v1410
          %v1495 = vpop.f32.mrf.mxu0
          %v1496 = vadd.f32 %v1458, %v1495
          %1497 = vmatmul.f32.gmra.mxu0 %v1411
          %v1498 = vpop.f32.mrf.mxu0
          %v1499 = vadd.f32 %v1458, %v1498
          %1500 = vdwg.mxu0
          %1501 = vmatpush.msra.mxu0 %v1447
          %1502 = vmatpush.msra.mxu0 %v1446
          %1503 = vmatpush.msra.mxu0 %v1445
          %1504 = vmatpush.msra.mxu0 %v1444
          %1505 = vmatpush.msra.mxu0 %v1443
          %1506 = vmatpush.msra.mxu0 %v1442
          %1507 = vmatpush.msra.mxu0 %v1441
          %1508 = vmatpush.msra.mxu0 %v1440
          %1509 = vmatpush.msra.mxu0 %v1439
          %1510 = vmatpush.msra.mxu0 %v1438
          %1511 = vmatpush.msra.mxu0 %v1437
          %1512 = vmatpush.msra.mxu0 %v1436
          %1513 = vmatpush.msra.mxu0 %v1435
          %1514 = vmatpush.msra.mxu0 %v1434
          %1515 = vmatpush.msra.mxu0 %v1433
          %1516 = vmatpush.msra.mxu0 %v1432
          %1517 = vmatmul.f32.gmra.mxu0 %v1412
          %v1518 = vpop.f32.mrf.mxu0
          %v1519 = vadd.f32 %v1490, %v1518
          %1520 = vmatmul.f32.gmra.mxu0 %v1413
          %v1521 = vpop.f32.mrf.mxu0
          %v1522 = vadd.f32 %v1493, %v1521
          %1523 = vmatmul.f32.gmra.mxu0 %v1414
          %v1524 = vpop.f32.mrf.mxu0
          %v1525 = vadd.f32 %v1496, %v1524
          %1526 = vmatmul.f32.gmra.mxu0 %v1415
          %v1527 = vpop.f32.mrf.mxu0
          %v1528 = vadd.f32 %v1499, %v1527
          %1529 = vdwg.mxu0
          %1530 = vmatpush.msra.mxu0 0.0
          %1531 = vmatpush.msra.mxu0 0.0
          %1532 = vmatpush.msra.mxu0 0.0
          %1533 = vmatpush.msra.mxu0 0.0
          %1534 = vmatpush.msra.mxu0 0.0
          %1535 = vmatpush.msra.mxu0 0.0
          %1536 = vmatpush.msra.mxu0 0.0
          %1537 = vmatpush.msra.mxu0 0.0
          %1538 = vmatpush.msra.mxu0 %v1455
          %1539 = vmatpush.msra.mxu0 %v1454
          %1540 = vmatpush.msra.mxu0 %v1453
          %1541 = vmatpush.msra.mxu0 %v1452
          %1542 = vmatpush.msra.mxu0 %v1451
          %1543 = vmatpush.msra.mxu0 %v1450
          %1544 = vmatpush.msra.mxu0 %v1449
          %1545 = vmatpush.msra.mxu0 %v1448
          %1546 = vmatmul.f32.gmra.mxu0 %v1461
          %v1547 = vpop.f32.mrf.mxu0
          %v1548 = vadd.f32 %v1519, %v1547
          %1549 = vmatmul.f32.gmra.mxu0 %v1464
          %v1550 = vpop.f32.mrf.mxu0
          %v1551 = vadd.f32 %v1522, %v1550
          %1552 = vmatmul.f32.gmra.mxu0 %v1467
          %v1553 = vpop.f32.mrf.mxu0
          %v1554 = vadd.f32 %v1525, %v1553
          %1555 = vmatmul.f32.gmra.mxu0 %v1470
          %v1556 = vpop.f32.mrf.mxu0
          %v1557 = vadd.f32 %v1528, %v1556
          %1558 = vdwg.mxu0
          %v1559 = vxor.u32 %v1548, 2147483648
          %v1560 = vxor.u32 %v1551, 2147483648
          %v1561 = vxor.u32 %v1554, 2147483648
          %v1562 = vxor.u32 %v1557, 2147483648
          %v1563 = vmul.f32 %v1559, 1.442695
          %v1564 = vpow.pop %v1563
          %v1565 = vmul.f32 %v1560, 1.442695
          %v1566 = vpow.pop %v1565
          %v1567 = vmul.f32 %v1561, 1.442695
          %v1568 = vpow.pop %v1567
          %v1569 = vmul.f32 %v1562, 1.442695
          %v1570 = vpow.pop %v1569
          %v1571 = vadd.f32 %v1564, 1.0
          %v1572 = vadd.f32 %v1566, 1.0
          %v1573 = vadd.f32 %v1568, 1.0
          %v1574 = vadd.f32 %v1570, 1.0
          %v1575 = vrcp.pop %v1571
          %v1576 = vmul.f32 %v1571, %v1575
          %v1577 = vsub.f32 1.0, %v1576
          %v1578 = vmul.f32 %v1575, %v1577
          %v1579 = vadd.f32 %v1575, %v1578
          %vm1580 = vweird.f32 %v1571
          %vm1581 = vweird.f32 %v1575
          %vm1582 = vmor %vm1580, %vm1581
          %v1583 = vsel %vm1582, %v1575, %v1579
          %v1584 = vand.u32 2147483647, %v1571
          %vm1585 = vcmp.eq.f32.partialorder %v1584, 8.507059e+37
          %v1586 = vand.u32 %v1571, 2147483648
          %v1587 = vor.u32 1.1754944e-38, %v1586
          %v1588 = vsel %vm1585, %v1587, %v1583
          %v1589 = vmul.f32 1.0, %v1588
          %v1590 = vrcp.pop %v1572
          %v1591 = vmul.f32 %v1572, %v1590
          %v1592 = vsub.f32 1.0, %v1591
          %v1593 = vmul.f32 %v1590, %v1592
          %v1594 = vadd.f32 %v1590, %v1593
          %vm1595 = vweird.f32 %v1572
          %vm1596 = vweird.f32 %v1590
          %vm1597 = vmor %vm1595, %vm1596
          %v1598 = vsel %vm1597, %v1590, %v1594
          %v1599 = vand.u32 2147483647, %v1572
          %vm1600 = vcmp.eq.f32.partialorder %v1599, 8.507059e+37
          %v1601 = vand.u32 %v1572, 2147483648
          %v1602 = vor.u32 1.1754944e-38, %v1601
          %v1603 = vsel %vm1600, %v1602, %v1598
          %v1604 = vmul.f32 1.0, %v1603
          %v1605 = vrcp.pop %v1573
          %v1606 = vmul.f32 %v1573, %v1605
          %v1607 = vsub.f32 1.0, %v1606
          %v1608 = vmul.f32 %v1605, %v1607
          %v1609 = vadd.f32 %v1605, %v1608
          %vm1610 = vweird.f32 %v1573
          %vm1611 = vweird.f32 %v1605
          %vm1612 = vmor %vm1610, %vm1611
          %v1613 = vsel %vm1612, %v1605, %v1609
          %v1614 = vand.u32 2147483647, %v1573
          %vm1615 = vcmp.eq.f32.partialorder %v1614, 8.507059e+37
          %v1616 = vand.u32 %v1573, 2147483648
          %v1617 = vor.u32 1.1754944e-38, %v1616
          %v1618 = vsel %vm1615, %v1617, %v1613
          %v1619 = vmul.f32 1.0, %v1618
          %v1620 = vrcp.pop %v1574
          %v1621 = vmul.f32 %v1574, %v1620
          %v1622 = vsub.f32 1.0, %v1621
          %v1623 = vmul.f32 %v1620, %v1622
          %v1624 = vadd.f32 %v1620, %v1623
          %vm1625 = vweird.f32 %v1574
          %vm1626 = vweird.f32 %v1620
          %vm1627 = vmor %vm1625, %vm1626
          %v1628 = vsel %vm1627, %v1620, %v1624
          %v1629 = vand.u32 2147483647, %v1574
          %vm1630 = vcmp.eq.f32.partialorder %v1629, 8.507059e+37
          %v1631 = vand.u32 %v1574, 2147483648
          %v1632 = vor.u32 1.1754944e-38, %v1631
          %v1633 = vsel %vm1630, %v1632, %v1628
          %v1634 = vmul.f32 1.0, %v1633
          %v1635 = vmul.f32 %v1589, %v408
          %v1636 = vmul.f32 %v1604, %v409
          %v1637 = vmul.f32 %v1619, %v410
          %v1638 = vmul.f32 %v1634, %v411
          %1639 = vmatpush.msra.mxu0 0.0
          %1640 = vmatpush.msra.mxu0 0.0
          %1641 = vmatpush.msra.mxu0 0.0
          %1642 = vmatpush.msra.mxu0 0.0
          %1643 = vmatpush.msra.mxu0 0.0
          %1644 = vmatpush.msra.mxu0 0.0
          %1645 = vmatpush.msra.mxu0 0.0
          %1646 = vmatpush.msra.mxu0 0.0
          %1647 = vmatpush.msra.mxu0 0.0
          %1648 = vmatpush.msra.mxu0 0.0
          %1649 = vmatpush.msra.mxu0 0.0
          %1650 = vmatpush.msra.mxu0 0.0
          %1651 = vmatpush.msra.mxu0 %v1638
          %1652 = vmatpush.msra.mxu0 %v1637
          %1653 = vmatpush.msra.mxu0 %v1636
          %1654 = vmatpush.msra.mxu0 %v1635
          %1655 = vmatmul.f32.gmra.mxu0 %v445
          %v1656 = vpop.f32.mrf.mxu0
          %v1657 = vadd.f32 0.0, %v1656
          %1658 = vmatmul.f32.gmra.mxu0 %v448
          %v1659 = vpop.f32.mrf.mxu0
          %v1660 = vadd.f32 0.0, %v1659
          %1661 = vmatmul.f32.gmra.mxu0 %v451
          %v1662 = vpop.f32.mrf.mxu0
          %v1663 = vadd.f32 0.0, %v1662
          %1664 = vmatmul.f32.gmra.mxu0 %v454
          %v1665 = vpop.f32.mrf.mxu0
          %v1666 = vadd.f32 0.0, %v1665
          %1667 = vdwg.mxu0
          %1668 = vmatpush.msra.mxu0 0.0
          %1669 = vmatpush.msra.mxu0 0.0
          %1670 = vmatpush.msra.mxu0 0.0
          %1671 = vmatpush.msra.mxu0 0.0
          %1672 = vmatpush.msra.mxu0 0.0
          %1673 = vmatpush.msra.mxu0 0.0
          %1674 = vmatpush.msra.mxu0 0.0
          %1675 = vmatpush.msra.mxu0 0.0
          %1676 = vmatpush.msra.mxu0 0.0
          %1677 = vmatpush.msra.mxu0 0.0
          %1678 = vmatpush.msra.mxu0 0.0
          %1679 = vmatpush.msra.mxu0 0.0
          %1680 = vmatpush.msra.mxu0 %v1638
          %1681 = vmatpush.msra.mxu0 %v1637
          %1682 = vmatpush.msra.mxu0 %v1636
          %1683 = vmatpush.msra.mxu0 %v1635
          %1684 = vmatmul.f32.gmra.mxu0 %v491
          %v1685 = vpop.f32.mrf.mxu0
          %v1686 = vadd.f32 0.0, %v1685
          %1687 = vmatmul.f32.gmra.mxu0 %v494
          %v1688 = vpop.f32.mrf.mxu0
          %v1689 = vadd.f32 0.0, %v1688
          %1690 = vmatmul.f32.gmra.mxu0 %v497
          %v1691 = vpop.f32.mrf.mxu0
          %v1692 = vadd.f32 0.0, %v1691
          %1693 = vmatmul.f32.gmra.mxu0 %v500
          %v1694 = vpop.f32.mrf.mxu0
          %v1695 = vadd.f32 0.0, %v1694
          %1696 = vdwg.mxu0
          %1697 = vmatpush.msra.mxu0 0.0
          %1698 = vmatpush.msra.mxu0 0.0
          %1699 = vmatpush.msra.mxu0 0.0
          %1700 = vmatpush.msra.mxu0 0.0
          %1701 = vmatpush.msra.mxu0 0.0
          %1702 = vmatpush.msra.mxu0 0.0
          %1703 = vmatpush.msra.mxu0 0.0
          %1704 = vmatpush.msra.mxu0 0.0
          %1705 = vmatpush.msra.mxu0 0.0
          %1706 = vmatpush.msra.mxu0 0.0
          %1707 = vmatpush.msra.mxu0 0.0
          %1708 = vmatpush.msra.mxu0 0.0
          %1709 = vmatpush.msra.mxu0 %v1638
          %1710 = vmatpush.msra.mxu0 %v1637
          %1711 = vmatpush.msra.mxu0 %v1636
          %1712 = vmatpush.msra.mxu0 %v1635
          %1713 = vmatmul.f32.gmra.mxu0 %v537
          %v1714 = vpop.f32.mrf.mxu0
          %v1715 = vadd.f32 0.0, %v1714
          %1716 = vmatmul.f32.gmra.mxu0 %v540
          %v1717 = vpop.f32.mrf.mxu0
          %v1718 = vadd.f32 0.0, %v1717
          %1719 = vmatmul.f32.gmra.mxu0 %v543
          %v1720 = vpop.f32.mrf.mxu0
          %v1721 = vadd.f32 0.0, %v1720
          %1722 = vmatmul.f32.gmra.mxu0 %v546
          %v1723 = vpop.f32.mrf.mxu0
          %v1724 = vadd.f32 0.0, %v1723
          %1725 = vdwg.mxu0
          %1726 = vmatpush.msra.mxu0 0.0
          %1727 = vmatpush.msra.mxu0 0.0
          %1728 = vmatpush.msra.mxu0 0.0
          %1729 = vmatpush.msra.mxu0 0.0
          %1730 = vmatpush.msra.mxu0 0.0
          %1731 = vmatpush.msra.mxu0 0.0
          %1732 = vmatpush.msra.mxu0 0.0
          %1733 = vmatpush.msra.mxu0 0.0
          %1734 = vmatpush.msra.mxu0 0.0
          %1735 = vmatpush.msra.mxu0 0.0
          %1736 = vmatpush.msra.mxu0 0.0
          %1737 = vmatpush.msra.mxu0 0.0
          %1738 = vmatpush.msra.mxu0 %v1638
          %1739 = vmatpush.msra.mxu0 %v1637
          %1740 = vmatpush.msra.mxu0 %v1636
          %1741 = vmatpush.msra.mxu0 %v1635
          %1742 = vmatmul.f32.gmra.mxu0 %v583
          %v1743 = vpop.f32.mrf.mxu0
          %v1744 = vadd.f32 0.0, %v1743
          %1745 = vmatmul.f32.gmra.mxu0 %v586
          %v1746 = vpop.f32.mrf.mxu0
          %v1747 = vadd.f32 0.0, %v1746
          %1748 = vmatmul.f32.gmra.mxu0 %v589
          %v1749 = vpop.f32.mrf.mxu0
          %v1750 = vadd.f32 0.0, %v1749
          %1751 = vmatmul.f32.gmra.mxu0 %v592
          %v1752 = vpop.f32.mrf.mxu0
          %v1753 = vadd.f32 0.0, %v1752
          %1754 = vdwg.mxu0
          %1759 = vrot.lane.b32.xlu0 %v1657, 32
          %v1760 = vpop.permute.xlu0 %1759
          %1761 = vrot.lane.b32.xlu0 %v1660, 32
          %v1762 = vpop.permute.xlu0 %1761
          %1763 = vrot.lane.b32.xlu0 %v1663, 32
          %v1764 = vpop.permute.xlu0 %1763
          %1765 = vrot.lane.b32.xlu0 %v1666, 32
          %v1766 = vpop.permute.xlu0 %1765
          %1775 = vrot.lane.b32.xlu0 %v1686, 64
          %v1776 = vpop.permute.xlu0 %1775
          %1777 = vrot.lane.b32.xlu0 %v1689, 64
          %v1778 = vpop.permute.xlu0 %1777
          %1779 = vrot.lane.b32.xlu0 %v1692, 64
          %v1780 = vpop.permute.xlu0 %1779
          %1781 = vrot.lane.b32.xlu0 %v1695, 64
          %v1782 = vpop.permute.xlu0 %1781
          %1791 = vrot.lane.b32.xlu0 %v1715, 96
          %v1792 = vpop.permute.xlu0 %1791
          %1793 = vrot.lane.b32.xlu0 %v1718, 96
          %v1794 = vpop.permute.xlu0 %1793
          %1795 = vrot.lane.b32.xlu0 %v1721, 96
          %v1796 = vpop.permute.xlu0 %1795
          %1797 = vrot.lane.b32.xlu0 %v1724, 96
          %v1798 = vpop.permute.xlu0 %1797
          %v1803 = vsel %vm443, %v1635, %v1760
          %v1804 = vsel %vm443, %v1636, %v1762
          %v1805 = vsel %vm443, %v1637, %v1764
          %v1806 = vsel %vm443, %v1638, %v1766
          %v1807 = vsel %vm1056, %v1803, %v1776
          %v1808 = vsel %vm1056, %v1804, %v1778
          %v1809 = vsel %vm1056, %v1805, %v1780
          %v1810 = vsel %vm1056, %v1806, %v1782
          %v1811 = vsel %vm1061, %v1807, %v1792
          %v1812 = vsel %vm1061, %v1808, %v1794
          %v1813 = vsel %vm1061, %v1809, %v1796
          %v1814 = vsel %vm1061, %v1810, %v1798
          %v1815 = vld [vmem:[%s7] sm:$0xff]
          %v1816 = vld [vmem:[%s7 + $0x8] sm:$0xff]
          %v1817 = vld [vmem:[%s7 + $0x10] sm:$0xff]
          %v1818 = vld [vmem:[%s7 + $0x18] sm:$0xff]
          %v1819 = vld [vmem:[%s7 + $0x20] sm:$0xff]
          %v1820 = vld [vmem:[%s7 + $0x28] sm:$0xff]
          %v1821 = vld [vmem:[%s7 + $0x30] sm:$0xff]
          %v1822 = vld [vmem:[%s7 + $0x38] sm:$0xff]
          %v1823 = vld [vmem:[%s7 + $0x40] sm:$0xff]
          %v1824 = vld [vmem:[%s7 + $0x48] sm:$0xff]
          %v1825 = vld [vmem:[%s7 + $0x50] sm:$0xff]
          %v1826 = vld [vmem:[%s7 + $0x58] sm:$0xff]
          %v1827 = vld [vmem:[%s7 + $0x60] sm:$0xff]
          %v1828 = vld [vmem:[%s7 + $0x68] sm:$0xff]
          %v1829 = vld [vmem:[%s7 + $0x70] sm:$0xff]
          %v1830 = vld [vmem:[%s7 + $0x78] sm:$0xff]
          %v1831 = vld [vmem:[%s7 + $0x80] sm:$0xff]
          %v1832 = vld [vmem:[%s7 + $0x88] sm:$0xff]
          %v1833 = vld [vmem:[%s7 + $0x90] sm:$0xff]
          %v1834 = vld [vmem:[%s7 + $0x98] sm:$0xff]
          %v1836 = vsel %vm443, %v1744, 0
          %v1839 = vsel %vm443, %v1747, 0
          %v1842 = vsel %vm443, %v1750, 0
          %v1845 = vsel %vm443, %v1753, 0
          %1847 = vmatpush.msra.mxu0 %v1830
          %1848 = vmatpush.msra.mxu0 %v1829
          %1849 = vmatpush.msra.mxu0 %v1828
          %1850 = vmatpush.msra.mxu0 %v1827
          %1851 = vmatpush.msra.mxu0 %v1826
          %1852 = vmatpush.msra.mxu0 %v1825
          %1853 = vmatpush.msra.mxu0 %v1824
          %1854 = vmatpush.msra.mxu0 %v1823
          %1855 = vmatpush.msra.mxu0 %v1822
          %1856 = vmatpush.msra.mxu0 %v1821
          %1857 = vmatpush.msra.mxu0 %v1820
          %1858 = vmatpush.msra.mxu0 %v1819
          %1859 = vmatpush.msra.mxu0 %v1818
          %1860 = vmatpush.msra.mxu0 %v1817
          %1861 = vmatpush.msra.mxu0 %v1816
          %1862 = vmatpush.msra.mxu0 %v1815
          %1863 = vmatmul.f32.gmra.mxu0 %v1811
          %v1864 = vpop.f32.mrf.mxu0
          %v1865 = vadd.f32 0.0, %v1864
          %1866 = vmatmul.f32.gmra.mxu0 %v1812
          %v1867 = vpop.f32.mrf.mxu0
          %v1868 = vadd.f32 0.0, %v1867
          %1869 = vmatmul.f32.gmra.mxu0 %v1813
          %v1870 = vpop.f32.mrf.mxu0
          %v1871 = vadd.f32 0.0, %v1870
          %1872 = vmatmul.f32.gmra.mxu0 %v1814
          %v1873 = vpop.f32.mrf.mxu0
          %v1874 = vadd.f32 0.0, %v1873
          %1875 = vdwg.mxu0
          %1876 = vmatpush.msra.mxu0 0.0
          %1877 = vmatpush.msra.mxu0 0.0
          %1878 = vmatpush.msra.mxu0 0.0
          %1879 = vmatpush.msra.mxu0 0.0
          %1880 = vmatpush.msra.mxu0 0.0
          %1881 = vmatpush.msra.mxu0 0.0
          %1882 = vmatpush.msra.mxu0 0.0
          %1883 = vmatpush.msra.mxu0 0.0
          %1884 = vmatpush.msra.mxu0 0.0
          %1885 = vmatpush.msra.mxu0 0.0
          %1886 = vmatpush.msra.mxu0 0.0
          %1887 = vmatpush.msra.mxu0 0.0
          %1888 = vmatpush.msra.mxu0 %v1834
          %1889 = vmatpush.msra.mxu0 %v1833
          %1890 = vmatpush.msra.mxu0 %v1832
          %1891 = vmatpush.msra.mxu0 %v1831
          %1892 = vmatmul.f32.gmra.mxu0 %v1836
          %v1893 = vpop.f32.mrf.mxu0
          %v1894 = vadd.f32 %v1865, %v1893
          %1895 = vmatmul.f32.gmra.mxu0 %v1839
          %v1896 = vpop.f32.mrf.mxu0
          %v1897 = vadd.f32 %v1868, %v1896
          %1898 = vmatmul.f32.gmra.mxu0 %v1842
          %v1899 = vpop.f32.mrf.mxu0
          %v1900 = vadd.f32 %v1871, %v1899
          %1901 = vmatmul.f32.gmra.mxu0 %v1845
          %v1902 = vpop.f32.mrf.mxu0
          %v1903 = vadd.f32 %v1874, %v1902
          %1904 = vdwg.mxu0
          %1909 = vrot.lane.b32.xlu0 %v1894, 64
          %v1910 = vpop.permute.xlu0 %1909
          %1911 = vrot.lane.b32.xlu0 %v1897, 64
          %v1912 = vpop.permute.xlu0 %1911
          %1913 = vrot.lane.b32.xlu0 %v1900, 64
          %v1914 = vpop.permute.xlu0 %1913
          %1915 = vrot.lane.b32.xlu0 %v1903, 64
          %v1916 = vpop.permute.xlu0 %1915
          %v1921 = vadd.f32 %v1548, %v1910
          %v1922 = vadd.f32 %v1551, %v1912
          %v1923 = vadd.f32 %v1554, %v1914
          %v1924 = vadd.f32 %v1557, %v1916
          %v1925 = vtanh.pop %v1921
          %v1926 = vtanh.pop %v1922
          %v1927 = vtanh.pop %v1923
          %v1928 = vtanh.pop %v1924
          %v1929 = vmul.f32 %v1589, %v1245
          %v1930 = vmul.f32 %v1604, %v1247
          %v1931 = vmul.f32 %v1619, %v1249
          %v1932 = vmul.f32 %v1634, %v1251
          %v1933 = vsub.f32 1.0, %v1589
          %v1934 = vsub.f32 1.0, %v1604
          %v1935 = vsub.f32 1.0, %v1619
          %v1936 = vsub.f32 1.0, %v1634
          %1941 = vrot.lane.b32.xlu0 %v1925, 96
          %v1942 = vpop.permute.xlu0 %1941
          %1943 = vrot.lane.b32.xlu0 %v1926, 96
          %v1944 = vpop.permute.xlu0 %1943
          %1945 = vrot.lane.b32.xlu0 %v1927, 96
          %v1946 = vpop.permute.xlu0 %1945
          %1947 = vrot.lane.b32.xlu0 %v1928, 96
          %v1948 = vpop.permute.xlu0 %1947
          %v1953 = vmul.f32 %v1933, %v1942
          %v1954 = vmul.f32 %v1934, %v1944
          %v1955 = vmul.f32 %v1935, %v1946
          %v1956 = vmul.f32 %v1936, %v1948
          %v1957 = vadd.f32 %v1929, %v1953
          %v1958 = vadd.f32 %v1930, %v1954
          %v1959 = vadd.f32 %v1931, %v1955
          %v1960 = vadd.f32 %v1932, %v1956
          %1965 = vrot.lane.b32.xlu0 %v1957, 96
          %v1966 = vpop.permute.xlu0 %1965
          %1967 = vrot.lane.b32.xlu0 %v1958, 96
          %v1968 = vpop.permute.xlu0 %1967
          %1969 = vrot.lane.b32.xlu0 %v1959, 96
          %v1970 = vpop.permute.xlu0 %1969
          %1971 = vrot.lane.b32.xlu0 %v1960, 96
          %v1972 = vpop.permute.xlu0 %1971
          %s1977 = scalar_lea.vmem %s371, %s412 [#allocation2]
          %1978 = vst.msk [vmem:[%s1977] sm:$0xff] %vm443, %v1966
          %1979 = vst.msk [vmem:[%s1977 + $0x8] sm:$0xff] %vm443, %v1968
          %1980 = vst.msk [vmem:[%s1977 + $0x10] sm:$0xff] %vm443, %v1970
          %1981 = vst.msk [vmem:[%s1977 + $0x18] sm:$0xff] %vm443, %v1972
        $region61: #{tpu_custom_call.1} parent=55 // loop_footer
          %s403 = sadd.s32 1, %s399
        $region62: #{tpu_custom_call.1} parent=55 // loop_footer_branch
          %398 = sbr.rel target = $region58
        $region63: #{tpu_custom_call.1} parent=55 // loop_exit
          _
        %vm1982 = vcmask 261120
        %1983 = vst.msk [vmem:[%s378] sm:$0xff] %vm1982, %v404
        %1984 = vst.msk [vmem:[%s378 + $0x8] sm:$0xff] %vm1982, %v405
        %1985 = vst.msk [vmem:[%s378 + $0x10] sm:$0xff] %vm1982, %v406
        %1986 = vst.msk [vmem:[%s378 + $0x18] sm:$0xff] %vm1982, %v407
        %s1987 = scalar_lea.vmem %s378, 32 [#allocation4]
        %1988 = vst.msk [vmem:[%s1987] sm:$0xff] %vm1982, %v408
        %1989 = vst.msk [vmem:[%s1987 + $0x8] sm:$0xff] %vm1982, %v409
        %1990 = vst.msk [vmem:[%s1987 + $0x10] sm:$0xff] %vm1982, %v410
        %1991 = vst.msk [vmem:[%s1987 + $0x18] sm:$0xff] %vm1982, %v411
        %s1992 = sand.u32 %s235, 1
        %s1993 = scalar_lea.sflag [#allocation3], %s1992
        %s1994 = sand.u32 %s235, 1
        %s1995 = smul.addr %s1994, 256
        %s1996 = scalar_lea.vmem [#allocation2], %s1995
        %s1997 = sand.u32 %s261, 1
        %s1998 = scalar_lea.sflag [#allocation5], %s1997
        %s1999 = sand.u32 %s261, 1
        %s2000 = smul.addr %s1999, 64
        %s2001 = scalar_lea.vmem [#allocation4], %s2000
        // Predicated region
        $region64: #{tpu_custom_call.1} parent=55 // pred_check
          %p2002 = pneg %p245
        $region65: #{tpu_custom_call.1} parent=55 // pred_check_branch
          %2004 = sbr.rel (%p2002) target = $region67
        $region66: #{tpu_custom_call.1} parent=55 // pred_region
          %2006 = vsyncadd %s1993, 0
          %s2007 = smul.addr %s28, 32
          %s2008 = smul.addr %s2007, 8
          %s2009 = scalar_lea.hbm %s9, %s2008
          %s2010 = sshll.u32 %s1996, 4
          %s2011 = int_to_ptr.vmem [resolvable:$true] %s2010
          %s2012 = sshll.u32 %s2009, 4
          %s2013 = int_to_ptr.hbm [resolvable:$true] %s2012
          %2018 = dma.vmem_to_hbm [thread:$0]  %s2011, 4096, %s2013, %s1993, 128, 128, 8
        $region67: #{tpu_custom_call.1} parent=55 // pred_fallthru
          _
        // Predicated region
        $region68: #{tpu_custom_call.1} parent=55 // pred_check
          %p2019 = pneg %p271
        $region69: #{tpu_custom_call.1} parent=55 // pred_check_branch
          %2021 = sbr.rel (%p2019) target = $region71
        $region70: #{tpu_custom_call.1} parent=55 // pred_region
          %2023 = vsyncadd %s1998, 0
          %s2024 = smul.addr %s28, 8
          %s2025 = smul.addr %s2024, 8
          %s2026 = scalar_lea.hbm %s10, %s2025
          %s2027 = sshll.u32 %s2001, 4
          %s2028 = int_to_ptr.vmem [resolvable:$true] %s2027
          %s2029 = sshll.u32 %s2026, 4
          %s2030 = int_to_ptr.hbm [resolvable:$true] %s2029
          %2035 = dma.vmem_to_hbm [thread:$0]  %s2028, 1024, %s2030, %s1998, 128, 128, 8
        $region71: #{tpu_custom_call.1} parent=55 // pred_fallthru
          _
      $region56: #{tpu_custom_call.1} parent=5 // pred_fallthru
        _
      %p2036 = scmp.le.s32.totalorder 2, %s23
      // Predicated region
      $region72: #{tpu_custom_call.1} parent=5 // pred_check
        %p2037 = pneg %p2036
      $region73: #{tpu_custom_call.1} parent=5 // pred_check_branch
        %2039 = sbr.rel (%p2037) target = $region75
      $region74: #{tpu_custom_call.1} parent=5 // pred_region
        %s2040 = ssub.s32 %s23, 2
        // Predicated region
        $region76: #{tpu_custom_call.1} parent=74 // pred_check
          %p2041 = pneg %p251
        $region77: #{tpu_custom_call.1} parent=74 // pred_check_branch
          %2043 = sbr.rel (%p2041) target = $region79
        $region78: #{tpu_custom_call.1} parent=74 // pred_region
          %s2044 = sand.u32 %s236, 1
          %s2045 = scalar_lea.sflag [#allocation3], %s2044
          %s2046 = sand.u32 %s236, 1
          %s2047 = smul.addr %s2046, 256
          %s2048 = scalar_lea.vmem [#allocation2], %s2047
          %2050 = dma.done %s2045, 4096
        $region79: #{tpu_custom_call.1} parent=74 // pred_fallthru
          _
        // Predicated region
        $region80: #{tpu_custom_call.1} parent=74 // pred_check
          %p2051 = pneg %p277
        $region81: #{tpu_custom_call.1} parent=74 // pred_check_branch
          %2053 = sbr.rel (%p2051) target = $region83
        $region82: #{tpu_custom_call.1} parent=74 // pred_region
          %s2054 = sand.u32 %s262, 1
          %s2055 = scalar_lea.sflag [#allocation5], %s2054
          %s2056 = sand.u32 %s262, 1
          %s2057 = smul.addr %s2056, 64
          %s2058 = scalar_lea.vmem [#allocation4], %s2057
          %2060 = dma.done %s2055, 1024
        $region83: #{tpu_custom_call.1} parent=74 // pred_fallthru
          _
      $region75: #{tpu_custom_call.1} parent=5 // pred_fallthru
        _
    $region6: #{tpu_custom_call.1} parent=1 // loop_footer
      %s27 = sadd.s32 1, %s23
    $region7: #{tpu_custom_call.1} parent=1 // loop_footer_branch
      %22 = sbr.rel target = $region3
    $region8: #{tpu_custom_call.1} parent=1 // loop_exit
      _
    %2061 = vsyncpa [#allocation3], 1
    %s2062 = scalar_lea.sflag [#allocation3], 1
    %2063 = vsyncpa %s2062, 1
    %2064 = vsyncpa [#allocation5], 1
    %s2065 = scalar_lea.sflag [#allocation5], 1
    %2066 = vsyncpa %s2065, 1

</llo_original>
